<compile_context>
chip_gen: v5e
topology: v5e:2x2
jax: 0.10.0
libtpu: 0.0.40
codegen_flags: <defaults>
</compile_context>

<pallas_src>
import math
import numpy as np
import jax
import jax.numpy as jnp
from jax import lax
from jax.experimental import pallas as pl
from jax.experimental.pallas import tpu as pltpu


# ----------------------------- Pallas kernel --------------------------------
def repeat_autoencoder_kernel(xg_ref,    # (T, TB, 4H) f32: x@W_ih^T + b (encoder), gates (i,f,o,2g), time-major
                              ewhh_ref,  # (H, 4H)     encoder W_hh^T (i,f,o,2g)   f32 or bf16
                              dwih_ref,  # (H, 4O)     decoder W_ih^T (i,f,o,2g)
                              dwhh_ref,  # (O, 4O)     decoder W_hh^T (i,f,o,2g)
                              db_ref,    # (1, 4O)     decoder b_ih + b_hh (i,f,o,2g)  f32
                              out_ref):  # (TB, T*O)   f32, lane-dense slab, batch-first
    T, TB, _ = xg_ref.shape
    H = ewhh_ref.shape[0]
    O = dwhh_ref.shape[0]

    ewhh = ewhh_ref[...]
    dwih = dwih_ref[...]
    dwhh = dwhh_ref[...]
    db = db_ref[...]
    mm_dtype = ewhh.dtype          # f32 or bf16 (MXU operands only)

    def lstm_cell(gates, c_prev, hid):
        # g-gate columns/bias were pre-scaled by 2 at pack time, so the g slice holds 2g
        # and tanh(g) = 2*sigmoid(2g) - 1:  ONE sigmoid launch over the whole (TB, 4*hid)
        # vreg + one VPU fma, plus the tanh(c) launch -> 2 EUP launches / step.
        s = jax.nn.sigmoid(gates)
        i = s[:, 0 * hid:1 * hid]
        f = s[:, 1 * hid:2 * hid]
        o = s[:, 2 * hid:3 * hid]
        g = 2.0 * s[:, 3 * hid:4 * hid] - 1.0
        c = f * c_prev + i * g
        h = o * jnp.tanh(c)
        return h, c

    # ---------------- encoder ------------------------------------------------
    # Input-gate contributions (incl. bias) are precomputed in the wrapper; only the
    # recurrent matmul sits on the serial dependency chain.  Loops fully unrolled
    # (T static & small) so the LLO scheduler sees every step.
    # TODO(synk): if the bundle shows a W_hh weight push per unrolled step, stage it once
    #             via pltpu.matmul_push_rhs / matmul_acc_lhs / matmul_pop across the steps.
    # TODO(synk): for production-scale T (>~32), switch to lax.fori_loop(..., unroll=k) and
    #             a time-chunked 'arbitrary' grid axis with persistent h/c VMEM scratch so
    #             xg / out stream instead of being fully resident.
    h = jnp.zeros((TB, H), jnp.float32)
    c = jnp.zeros((TB, H), jnp.float32)
    for t in range(T):
        gates = xg_ref[t] + jnp.dot(h.astype(mm_dtype), ewhh,
                                    preferred_element_type=jnp.float32)
        h, c = lstm_cell(gates, c, H)
    h_enc = h                                                            # (TB, H)

    # ---------------- decoder ------------------------------------------------
    # Decoder input is the repeated h_enc -> its gate contribution is constant in time;
    # compute it (and the bias broadcast) once, outside the loop.
    x_gates = jnp.dot(h_enc.astype(mm_dtype), dwih,
                      preferred_element_type=jnp.float32) + db           # (TB, 4O)

    hd = jnp.zeros((TB, O), jnp.float32)
    cd = jnp.zeros((TB, O), jnp.float32)
    for t in range(T):
        gates = x_gates + jnp.dot(hd.astype(mm_dtype), dwhh,
                                  preferred_element_type=jnp.float32)
        hd, cd = lstm_cell(gates, cd, O)
        # Per-step static-slice store into the lane-dense (TB, T*O) slab: off the serial
        # critical path and frees hd's vreg immediately (no end-of-loop concatenate).
        out_ref[:, t * O:(t + 1) * O] = hd.astype(out_ref.dtype)


# ------------------------------ wrapper --------------------------------------
def repeat_autoencoder_forward(x, packed_params, *,
                               matmul_dtype=jnp.float32, batch_block=None):
    """x: (B, T, Din) float32 -> (B, T, O) float32 (matches the PyTorch forward).

    matmul_dtype: jnp.bfloat16 uses the bf16-native MXU on v5e/v6e/v7x for the recurrent
                  matmuls (f32 accumulation and f32 gate math are kept either way; the
                  recurrent state is re-quantized each step, so error compounds mildly
                  with T).  Keep f32 for exact checks.
    batch_block : sequences handled per grid step.  Default = B (grid of 1), which is
                  right for v5e/v6e (single TensorCore: extra grid steps are pure serial
                  overhead, ~0.35 us each).  Make it as large as VMEM allows (>=128 rows
                  when B is large) so each step feeds the MXU a real M dimension.  On v7x
                  (2 TCs, 64 MiB VMEM) use batch_block = B//2 to split the 'parallel'
                  batch axis across cores — but only if B//2 is a multiple of 8 and still
                  large enough to amortize per-step latency; re-budget VMEM for 64 MiB
                  (double-buffered xg/out blocks + all unrolled live values) or set
                  pltpu.CompilerParams(vmem_limit_bytes=...) explicitly.
    """
    B, T, Din = x.shape
    ewih, ewhh, eb, dwih, dwhh, db = packed_params
    H = ewhh.shape[0]
    O = dwhh.shape[0]

    if batch_block is None:
        batch_block = B
    assert B % batch_block == 0, "B must be divisible by batch_block"
    # (8,128) rule: second-to-last dims of the xg / out blocks must be a multiple of 8
    # or the full array extent.
    assert batch_block == B or batch_block % 8 == 0, \
        "batch_block must be B or a multiple of 8"

    # Encoder input GEMM hoisted out of the kernel: it is off the recurrent dependency
    # chain, XLA pipelines it ahead of the pallas_call, and the kernel then gets a
    # perfectly tiled time-major (T, 4H) = (8, 128) block with no in-kernel reshape.
    # Bias folded in exactly once; gate order already (i, f, o, 2g) from pack_params.
    xg = jnp.einsum("btd,dg->tbg", x.astype(jnp.float32), ewih) + eb      # (T, B, 4H) f32

    # bf16 applies to the in-kernel MXU operands only; biases / xg stay f32.
    ewhh_m = ewhh.astype(matmul_dtype)
    dwih_m = dwih.astype(matmul_dtype)
    dwhh_m = dwhh.astype(matmul_dtype)

    def resident(a):   # weights/bias: constant index map -> stay resident across grid steps
        return pl.BlockSpec(a.shape, lambda b: (0,) * a.ndim)

    out_slab = pl.pallas_call(
        repeat_autoencoder_kernel,
        out_shape=jax.ShapeDtypeStruct((B, T * O), jnp.float32),
        grid=(B // batch_block,),
        in_specs=[
            pl.BlockSpec((T, batch_block, 4 * H), lambda b: (0, b, 0)),
            resident(ewhh_m), resident(dwih_m), resident(dwhh_m), resident(db),
        ],
        out_specs=pl.BlockSpec((batch_block, T * O), lambda b: (b, 0)),
        compiler_params=pltpu.CompilerParams(
            dimension_semantics=("parallel",)),
    )(xg, ewhh_m, dwih_m, dwhh_m, db)

    # Output is batch-first and lane-dense; only a free reshape remains.
    return out_slab.reshape(B, T, O)


# -------------------------- parameter construction ---------------------------
def init_pytorch_params(key, input_dim, hidden_dim, output_dim):
    """PyTorch-layout LSTM params: W_ih (4H, Din), W_hh (4H, H), b_ih, b_hh; gate order (i,f,g,o)."""
    ks = jax.random.split(key, 8)

    def u(k, shape, bound):
        return jax.random.uniform(k, shape, jnp.float32, minval=-bound, maxval=bound)

    be = 1.0 / math.sqrt(hidden_dim)
    bd = 1.0 / math.sqrt(output_dim)
    return (
        u(ks[0], (4 * hidden_dim, input_dim), be),    # encoder W_ih
        u(ks[1], (4 * hidden_dim, hidden_dim), be),   # encoder W_hh
        u(ks[2], (4 * hidden_dim,), be),              # encoder b_ih
        u(ks[3], (4 * hidden_dim,), be),              # encoder b_hh
        u(ks[4], (4 * output_dim, hidden_dim), bd),   # decoder W_ih
        u(ks[5], (4 * output_dim, output_dim), bd),   # decoder W_hh
        u(ks[6], (4 * output_dim,), bd),              # decoder b_ih
        u(ks[7], (4 * output_dim,), bd),              # decoder b_hh
    )


def pack_params(pt_params):
    """PyTorch layout -> kernel layout: transpose for right-multiply, sum biases,
    reorder gates (i, f, g, o) -> (i, f, o, g), and pre-scale the g block by 2
    so the kernel can use the single-sigmoid trick tanh(g) = 2*sigmoid(2g) - 1."""
    e_wih, e_whh, e_bih, e_bhh, d_wih, d_whh, d_bih, d_bhh = pt_params
    H = e_whh.shape[1]
    O = d_whh.shape[1]

    def reorder_cols(w_t, hid):   # w_t: (in, 4*hid), gate blocks along columns
        i = w_t[:, 0 * hid:1 * hid]
        f = w_t[:, 1 * hid:2 * hid]
        g = w_t[:, 2 * hid:3 * hid]
        o = w_t[:, 3 * hid:4 * hid]
        return jnp.concatenate([i, f, o, 2.0 * g], axis=1)

    def reorder_bias(b, hid):
        i = b[0 * hid:1 * hid]
        f = b[1 * hid:2 * hid]
        g = b[2 * hid:3 * hid]
        o = b[3 * hid:4 * hid]
        return jnp.concatenate([i, f, o, 2.0 * g])

    return (
        reorder_cols(e_wih.T, H),                          # (Din, 4H)
        reorder_cols(e_whh.T, H),                          # (H,   4H)
        reorder_bias(e_bih + e_bhh, H)[None, :],           # (1,   4H)
        reorder_cols(d_wih.T, O),                          # (H,   4O)
        reorder_cols(d_whh.T, O),                          # (O,   4O)
        reorder_bias(d_bih + d_bhh, O)[None, :],           # (1,   4O)
    )


# --------------------------- pure-JAX reference -------------------------------
def reference_forward(x, pt_params):
    """Exact PyTorch nn.LSTM semantics (gate order i,f,g,o) on raw PyTorch-layout params."""
    e_wih, e_whh, e_bih, e_bhh, d_wih, d_whh, d_bih, d_bhh = pt_params
    B, T, _ = x.shape
    H = e_whh.shape[1]
    O = d_whh.shape[1]

    def cell(xt, h, c, w_ih, w_hh, b_ih, b_hh, hid):
        gates = xt @ w_ih.T + h @ w_hh.T + b_ih + b_hh
        i = jax.nn.sigmoid(gates[:, 0 * hid:1 * hid])
        f = jax.nn.sigmoid(gates[:, 1 * hid:2 * hid])
        g = jnp.tanh(gates[:, 2 * hid:3 * hid])
        o = jax.nn.sigmoid(gates[:, 3 * hid:4 * hid])
        c = f * c + i * g
        return o * jnp.tanh(c), c

    h = jnp.zeros((B, H), jnp.float32)
    c = jnp.zeros((B, H), jnp.float32)
    for t in range(T):
        h, c = cell(x[:, t, :], h, c, e_wih, e_whh, e_bih, e_bhh, H)

    hd = jnp.zeros((B, O), jnp.float32)
    cd = jnp.zeros((B, O), jnp.float32)
    outs = []
    for t in range(T):
        hd, cd = cell(h, hd, cd, d_wih, d_whh, d_bih, d_bhh, O)
        outs.append(hd)
    return jnp.stack(outs, axis=1)                          # (B, T, O)


# --------------------------------- main ---------------------------------------
if __name__ == "__main__":
    B, T = 2, 8
    INPUT_DIM, HIDDEN_DIM, OUTPUT_DIM = 16, 32, 16

    key = jax.random.PRNGKey(0)
    kx, kp, kx2 = jax.random.split(key, 3)
    x = jax.random.normal(kx, (B, T, INPUT_DIM), dtype=jnp.float32)
    pt_params = init_pytorch_params(kp, INPUT_DIM, HIDDEN_DIM, OUTPUT_DIM)
    params = pack_params(pt_params)

    # --- f32 path (exact check against the PyTorch-semantics reference) ---
    out = jax.block_until_ready(repeat_autoencoder_forward(x, params))
    ref = jax.block_until_ready(reference_forward(x, pt_params))
    assert out.shape == (B, T, OUTPUT_DIM)
    np.testing.assert_allclose(np.asarray(out), np.asarray(ref), rtol=1e-4, atol=1e-4)

    # --- bf16 MXU operands (all generations): f32 accumulation, loose tolerance ---
    out_bf16 = jax.block_until_ready(
        repeat_autoencoder_forward(x, params, matmul_dtype=jnp.bfloat16))
    np.testing.assert_allclose(np.asarray(out_bf16), np.asarray(ref), rtol=5e-2, atol=5e-2)

    # --- batch-blocked "parallel" grid (exercises the v7x two-TensorCore split path) ---
    B2 = 16
    x2 = jax.random.normal(kx2, (B2, T, INPUT_DIM), dtype=jnp.float32)
    out2 = jax.block_until_ready(
        repeat_autoencoder_forward(x2, params, batch_block=8))
    ref2 = jax.block_until_ready(reference_forward(x2, pt_params))
    np.testing.assert_allclose(np.asarray(out2), np.asarray(ref2), rtol=1e-4, atol=1e-4)

    print("KERNEL_OK")
</pallas_src>

<mosaic_0001>
module attributes {stable_mosaic.version = 11 : i64} {
  func.func @repeat_autoencoder_kernel(%arg0: i32, %arg1: memref<8x2x128xf32, #tpu.memory_space<vmem>>, %arg2: memref<32x128xf32, #tpu.memory_space<vmem>>, %arg3: memref<32x64xf32, #tpu.memory_space<vmem>>, %arg4: memref<16x64xf32, #tpu.memory_space<vmem>>, %arg5: memref<1x64xf32, #tpu.memory_space<vmem>>, %arg6: memref<2x128xf32, #tpu.memory_space<vmem>>) attributes {dimension_semantics = [#tpu.dimension_semantics<parallel>], iteration_bounds = array<i64: 1>, scalar_prefetch = 0 : i64, scratch_operands = 0 : i64, tpu.core_type = #tpu.core_type<tc>, window_params = [{transform_indices = @transform_0, window_bounds = array<i64: 8, 2, 128>}, {pipeline_mode = #tpu.pipeline_mode<synchronous>, transform_indices = @transform_1, window_bounds = array<i64: 32, 128>}, {pipeline_mode = #tpu.pipeline_mode<synchronous>, transform_indices = @transform_2, window_bounds = array<i64: 32, 64>}, {pipeline_mode = #tpu.pipeline_mode<synchronous>, transform_indices = @transform_3, window_bounds = array<i64: 16, 64>}, {pipeline_mode = #tpu.pipeline_mode<synchronous>, transform_indices = @transform_4, window_bounds = array<i64: 1, 64>}, {transform_indices = @transform_5, window_bounds = array<i64: 2, 128>}]} {
    %c0 = arith.constant 0 : index
    %c0_0 = arith.constant 0 : index
    %0 = vector.load %arg2[%c0, %c0_0] : memref<32x128xf32, #tpu.memory_space<vmem>>, vector<32x128xf32>
    %c0_1 = arith.constant 0 : index
    %c0_2 = arith.constant 0 : index
    %1 = vector.load %arg3[%c0_1, %c0_2] : memref<32x64xf32, #tpu.memory_space<vmem>>, vector<32x64xf32>
    %c0_3 = arith.constant 0 : index
    %c0_4 = arith.constant 0 : index
    %2 = vector.load %arg4[%c0_3, %c0_4] : memref<16x64xf32, #tpu.memory_space<vmem>>, vector<16x64xf32>
    %c0_5 = arith.constant 0 : index
    %c0_6 = arith.constant 0 : index
    %3 = vector.load %arg5[%c0_5, %c0_6] : memref<1x64xf32, #tpu.memory_space<vmem>>, vector<1x64xf32>
    %cst = arith.constant 0.000000e+00 : f32
    %4 = vector.broadcast %cst : f32 to vector<2x32xf32>
    %cst_7 = arith.constant 0.000000e+00 : f32
    %5 = vector.broadcast %cst_7 : f32 to vector<2x32xf32>
    %c0_8 = arith.constant 0 : index
    %c0_9 = arith.constant 0 : index
    %c0_10 = arith.constant 0 : index
    %6 = vector.load %arg1[%c0_8, %c0_9, %c0_10] : memref<8x2x128xf32, #tpu.memory_space<vmem>>, vector<1x2x128xf32>
    %7 = vector.shape_cast %6 : vector<1x2x128xf32> to vector<2x128xf32>
    %cst_11 = arith.constant dense<0.000000e+00> : vector<2x128xf32>
    %8 = tpu.matmul %4, %0, %cst_11 {dimension_numbers = #tpu.dot_dimension_numbers<[1], [0], [0], [1], [0, 0, 1, 1], [], []>} : vector<2x32xf32>, vector<32x128xf32>, vector<2x128xf32> -> vector<2x128xf32>
    %9 = arith.addf %7, %8 : vector<2x128xf32>
    %10 = arith.negf %9 : vector<2x128xf32>
    %11 = math.exp %10 : vector<2x128xf32>
    %cst_12 = arith.constant 1.000000e+00 : f32
    %12 = vector.broadcast %cst_12 : f32 to vector<2x128xf32>
    %13 = arith.addf %12, %11 : vector<2x128xf32>
    %14 = arith.divf %12, %13 : vector<2x128xf32>
    %15 = vector.extract_strided_slice %14 {offsets = [0, 0], sizes = [2, 32], strides = [1, 1]} : vector<2x128xf32> to vector<2x32xf32>
    %16 = vector.extract_strided_slice %14 {offsets = [0, 32], sizes = [2, 32], strides = [1, 1]} : vector<2x128xf32> to vector<2x32xf32>
    %17 = vector.extract_strided_slice %14 {offsets = [0, 64], sizes = [2, 32], strides = [1, 1]} : vector<2x128xf32> to vector<2x32xf32>
    %18 = vector.extract_strided_slice %14 {offsets = [0, 96], sizes = [2, 32], strides = [1, 1]} : vector<2x128xf32> to vector<2x32xf32>
    %cst_13 = arith.constant 2.000000e+00 : f32
    %19 = vector.broadcast %cst_13 : f32 to vector<2x32xf32>
    %20 = arith.mulf %19, %18 : vector<2x32xf32>
    %cst_14 = arith.constant 1.000000e+00 : f32
    %21 = vector.broadcast %cst_14 : f32 to vector<2x32xf32>
    %22 = arith.subf %20, %21 : vector<2x32xf32>
    %23 = arith.mulf %16, %5 : vector<2x32xf32>
    %24 = arith.mulf %15, %22 : vector<2x32xf32>
    %25 = arith.addf %23, %24 : vector<2x32xf32>
    %26 = math.tanh %25 : vector<2x32xf32>
    %27 = arith.mulf %17, %26 : vector<2x32xf32>
    %c1 = arith.constant 1 : index
    %c0_15 = arith.constant 0 : index
    %c0_16 = arith.constant 0 : index
    %28 = vector.load %arg1[%c1, %c0_15, %c0_16] : memref<8x2x128xf32, #tpu.memory_space<vmem>>, vector<1x2x128xf32>
    %29 = vector.shape_cast %28 : vector<1x2x128xf32> to vector<2x128xf32>
    %cst_17 = arith.constant dense<0.000000e+00> : vector<2x128xf32>
    %30 = tpu.matmul %27, %0, %cst_17 {dimension_numbers = #tpu.dot_dimension_numbers<[1], [0], [0], [1], [0, 0, 1, 1], [], []>} : vector<2x32xf32>, vector<32x128xf32>, vector<2x128xf32> -> vector<2x128xf32>
    %31 = arith.addf %29, %30 : vector<2x128xf32>
    %32 = arith.negf %31 : vector<2x128xf32>
    %33 = math.exp %32 : vector<2x128xf32>
    %cst_18 = arith.constant 1.000000e+00 : f32
    %34 = vector.broadcast %cst_18 : f32 to vector<2x128xf32>
    %35 = arith.addf %34, %33 : vector<2x128xf32>
    %36 = arith.divf %34, %35 : vector<2x128xf32>
    %37 = vector.extract_strided_slice %36 {offsets = [0, 0], sizes = [2, 32], strides = [1, 1]} : vector<2x128xf32> to vector<2x32xf32>
    %38 = vector.extract_strided_slice %36 {offsets = [0, 32], sizes = [2, 32], strides = [1, 1]} : vector<2x128xf32> to vector<2x32xf32>
    %39 = vector.extract_strided_slice %36 {offsets = [0, 64], sizes = [2, 32], strides = [1, 1]} : vector<2x128xf32> to vector<2x32xf32>
    %40 = vector.extract_strided_slice %36 {offsets = [0, 96], sizes = [2, 32], strides = [1, 1]} : vector<2x128xf32> to vector<2x32xf32>
    %cst_19 = arith.constant 2.000000e+00 : f32
    %41 = vector.broadcast %cst_19 : f32 to vector<2x32xf32>
    %42 = arith.mulf %41, %40 : vector<2x32xf32>
    %cst_20 = arith.constant 1.000000e+00 : f32
    %43 = vector.broadcast %cst_20 : f32 to vector<2x32xf32>
    %44 = arith.subf %42, %43 : vector<2x32xf32>
    %45 = arith.mulf %38, %25 : vector<2x32xf32>
    %46 = arith.mulf %37, %44 : vector<2x32xf32>
    %47 = arith.addf %45, %46 : vector<2x32xf32>
    %48 = math.tanh %47 : vector<2x32xf32>
    %49 = arith.mulf %39, %48 : vector<2x32xf32>
    %c2 = arith.constant 2 : index
    %c0_21 = arith.constant 0 : index
    %c0_22 = arith.constant 0 : index
    %50 = vector.load %arg1[%c2, %c0_21, %c0_22] : memref<8x2x128xf32, #tpu.memory_space<vmem>>, vector<1x2x128xf32>
    %51 = vector.shape_cast %50 : vector<1x2x128xf32> to vector<2x128xf32>
    %cst_23 = arith.constant dense<0.000000e+00> : vector<2x128xf32>
    %52 = tpu.matmul %49, %0, %cst_23 {dimension_numbers = #tpu.dot_dimension_numbers<[1], [0], [0], [1], [0, 0, 1, 1], [], []>} : vector<2x32xf32>, vector<32x128xf32>, vector<2x128xf32> -> vector<2x128xf32>
    %53 = arith.addf %51, %52 : vector<2x128xf32>
    %54 = arith.negf %53 : vector<2x128xf32>
    %55 = math.exp %54 : vector<2x128xf32>
    %cst_24 = arith.constant 1.000000e+00 : f32
    %56 = vector.broadcast %cst_24 : f32 to vector<2x128xf32>
    %57 = arith.addf %56, %55 : vector<2x128xf32>
    %58 = arith.divf %56, %57 : vector<2x128xf32>
    %59 = vector.extract_strided_slice %58 {offsets = [0, 0], sizes = [2, 32], strides = [1, 1]} : vector<2x128xf32> to vector<2x32xf32>
    %60 = vector.extract_strided_slice %58 {offsets = [0, 32], sizes = [2, 32], strides = [1, 1]} : vector<2x128xf32> to vector<2x32xf32>
    %61 = vector.extract_strided_slice %58 {offsets = [0, 64], sizes = [2, 32], strides = [1, 1]} : vector<2x128xf32> to vector<2x32xf32>
    %62 = vector.extract_strided_slice %58 {offsets = [0, 96], sizes = [2, 32], strides = [1, 1]} : vector<2x128xf32> to vector<2x32xf32>
    %cst_25 = arith.constant 2.000000e+00 : f32
    %63 = vector.broadcast %cst_25 : f32 to vector<2x32xf32>
    %64 = arith.mulf %63, %62 : vector<2x32xf32>
    %cst_26 = arith.constant 1.000000e+00 : f32
    %65 = vector.broadcast %cst_26 : f32 to vector<2x32xf32>
    %66 = arith.subf %64, %65 : vector<2x32xf32>
    %67 = arith.mulf %60, %47 : vector<2x32xf32>
    %68 = arith.mulf %59, %66 : vector<2x32xf32>
    %69 = arith.addf %67, %68 : vector<2x32xf32>
    %70 = math.tanh %69 : vector<2x32xf32>
    %71 = arith.mulf %61, %70 : vector<2x32xf32>
    %c3 = arith.constant 3 : index
    %c0_27 = arith.constant 0 : index
    %c0_28 = arith.constant 0 : index
    %72 = vector.load %arg1[%c3, %c0_27, %c0_28] : memref<8x2x128xf32, #tpu.memory_space<vmem>>, vector<1x2x128xf32>
    %73 = vector.shape_cast %72 : vector<1x2x128xf32> to vector<2x128xf32>
    %cst_29 = arith.constant dense<0.000000e+00> : vector<2x128xf32>
    %74 = tpu.matmul %71, %0, %cst_29 {dimension_numbers = #tpu.dot_dimension_numbers<[1], [0], [0], [1], [0, 0, 1, 1], [], []>} : vector<2x32xf32>, vector<32x128xf32>, vector<2x128xf32> -> vector<2x128xf32>
    %75 = arith.addf %73, %74 : vector<2x128xf32>
    %76 = arith.negf %75 : vector<2x128xf32>
    %77 = math.exp %76 : vector<2x128xf32>
    %cst_30 = arith.constant 1.000000e+00 : f32
    %78 = vector.broadcast %cst_30 : f32 to vector<2x128xf32>
    %79 = arith.addf %78, %77 : vector<2x128xf32>
    %80 = arith.divf %78, %79 : vector<2x128xf32>
    %81 = vector.extract_strided_slice %80 {offsets = [0, 0], sizes = [2, 32], strides = [1, 1]} : vector<2x128xf32> to vector<2x32xf32>
    %82 = vector.extract_strided_slice %80 {offsets = [0, 32], sizes = [2, 32], strides = [1, 1]} : vector<2x128xf32> to vector<2x32xf32>
    %83 = vector.extract_strided_slice %80 {offsets = [0, 64], sizes = [2, 32], strides = [1, 1]} : vector<2x128xf32> to vector<2x32xf32>
    %84 = vector.extract_strided_slice %80 {offsets = [0, 96], sizes = [2, 32], strides = [1, 1]} : vector<2x128xf32> to vector<2x32xf32>
    %cst_31 = arith.constant 2.000000e+00 : f32
    %85 = vector.broadcast %cst_31 : f32 to vector<2x32xf32>
    %86 = arith.mulf %85, %84 : vector<2x32xf32>
    %cst_32 = arith.constant 1.000000e+00 : f32
    %87 = vector.broadcast %cst_32 : f32 to vector<2x32xf32>
    %88 = arith.subf %86, %87 : vector<2x32xf32>
    %89 = arith.mulf %82, %69 : vector<2x32xf32>
    %90 = arith.mulf %81, %88 : vector<2x32xf32>
    %91 = arith.addf %89, %90 : vector<2x32xf32>
    %92 = math.tanh %91 : vector<2x32xf32>
    %93 = arith.mulf %83, %92 : vector<2x32xf32>
    %c4 = arith.constant 4 : index
    %c0_33 = arith.constant 0 : index
    %c0_34 = arith.constant 0 : index
    %94 = vector.load %arg1[%c4, %c0_33, %c0_34] : memref<8x2x128xf32, #tpu.memory_space<vmem>>, vector<1x2x128xf32>
    %95 = vector.shape_cast %94 : vector<1x2x128xf32> to vector<2x128xf32>
    %cst_35 = arith.constant dense<0.000000e+00> : vector<2x128xf32>
    %96 = tpu.matmul %93, %0, %cst_35 {dimension_numbers = #tpu.dot_dimension_numbers<[1], [0], [0], [1], [0, 0, 1, 1], [], []>} : vector<2x32xf32>, vector<32x128xf32>, vector<2x128xf32> -> vector<2x128xf32>
    %97 = arith.addf %95, %96 : vector<2x128xf32>
    %98 = arith.negf %97 : vector<2x128xf32>
    %99 = math.exp %98 : vector<2x128xf32>
    %cst_36 = arith.constant 1.000000e+00 : f32
    %100 = vector.broadcast %cst_36 : f32 to vector<2x128xf32>
    %101 = arith.addf %100, %99 : vector<2x128xf32>
    %102 = arith.divf %100, %101 : vector<2x128xf32>
    %103 = vector.extract_strided_slice %102 {offsets = [0, 0], sizes = [2, 32], strides = [1, 1]} : vector<2x128xf32> to vector<2x32xf32>
    %104 = vector.extract_strided_slice %102 {offsets = [0, 32], sizes = [2, 32], strides = [1, 1]} : vector<2x128xf32> to vector<2x32xf32>
    %105 = vector.extract_strided_slice %102 {offsets = [0, 64], sizes = [2, 32], strides = [1, 1]} : vector<2x128xf32> to vector<2x32xf32>
    %106 = vector.extract_strided_slice %102 {offsets = [0, 96], sizes = [2, 32], strides = [1, 1]} : vector<2x128xf32> to vector<2x32xf32>
    %cst_37 = arith.constant 2.000000e+00 : f32
    %107 = vector.broadcast %cst_37 : f32 to vector<2x32xf32>
    %108 = arith.mulf %107, %106 : vector<2x32xf32>
    %cst_38 = arith.constant 1.000000e+00 : f32
    %109 = vector.broadcast %cst_38 : f32 to vector<2x32xf32>
    %110 = arith.subf %108, %109 : vector<2x32xf32>
    %111 = arith.mulf %104, %91 : vector<2x32xf32>
    %112 = arith.mulf %103, %110 : vector<2x32xf32>
    %113 = arith.addf %111, %112 : vector<2x32xf32>
    %114 = math.tanh %113 : vector<2x32xf32>
    %115 = arith.mulf %105, %114 : vector<2x32xf32>
    %c5 = arith.constant 5 : index
    %c0_39 = arith.constant 0 : index
    %c0_40 = arith.constant 0 : index
    %116 = vector.load %arg1[%c5, %c0_39, %c0_40] : memref<8x2x128xf32, #tpu.memory_space<vmem>>, vector<1x2x128xf32>
    %117 = vector.shape_cast %116 : vector<1x2x128xf32> to vector<2x128xf32>
    %cst_41 = arith.constant dense<0.000000e+00> : vector<2x128xf32>
    %118 = tpu.matmul %115, %0, %cst_41 {dimension_numbers = #tpu.dot_dimension_numbers<[1], [0], [0], [1], [0, 0, 1, 1], [], []>} : vector<2x32xf32>, vector<32x128xf32>, vector<2x128xf32> -> vector<2x128xf32>
    %119 = arith.addf %117, %118 : vector<2x128xf32>
    %120 = arith.negf %119 : vector<2x128xf32>
    %121 = math.exp %120 : vector<2x128xf32>
    %cst_42 = arith.constant 1.000000e+00 : f32
    %122 = vector.broadcast %cst_42 : f32 to vector<2x128xf32>
    %123 = arith.addf %122, %121 : vector<2x128xf32>
    %124 = arith.divf %122, %123 : vector<2x128xf32>
    %125 = vector.extract_strided_slice %124 {offsets = [0, 0], sizes = [2, 32], strides = [1, 1]} : vector<2x128xf32> to vector<2x32xf32>
    %126 = vector.extract_strided_slice %124 {offsets = [0, 32], sizes = [2, 32], strides = [1, 1]} : vector<2x128xf32> to vector<2x32xf32>
    %127 = vector.extract_strided_slice %124 {offsets = [0, 64], sizes = [2, 32], strides = [1, 1]} : vector<2x128xf32> to vector<2x32xf32>
    %128 = vector.extract_strided_slice %124 {offsets = [0, 96], sizes = [2, 32], strides = [1, 1]} : vector<2x128xf32> to vector<2x32xf32>
    %cst_43 = arith.constant 2.000000e+00 : f32
    %129 = vector.broadcast %cst_43 : f32 to vector<2x32xf32>
    %130 = arith.mulf %129, %128 : vector<2x32xf32>
    %cst_44 = arith.constant 1.000000e+00 : f32
    %131 = vector.broadcast %cst_44 : f32 to vector<2x32xf32>
    %132 = arith.subf %130, %131 : vector<2x32xf32>
    %133 = arith.mulf %126, %113 : vector<2x32xf32>
    %134 = arith.mulf %125, %132 : vector<2x32xf32>
    %135 = arith.addf %133, %134 : vector<2x32xf32>
    %136 = math.tanh %135 : vector<2x32xf32>
    %137 = arith.mulf %127, %136 : vector<2x32xf32>
    %c6 = arith.constant 6 : index
    %c0_45 = arith.constant 0 : index
    %c0_46 = arith.constant 0 : index
    %138 = vector.load %arg1[%c6, %c0_45, %c0_46] : memref<8x2x128xf32, #tpu.memory_space<vmem>>, vector<1x2x128xf32>
    %139 = vector.shape_cast %138 : vector<1x2x128xf32> to vector<2x128xf32>
    %cst_47 = arith.constant dense<0.000000e+00> : vector<2x128xf32>
    %140 = tpu.matmul %137, %0, %cst_47 {dimension_numbers = #tpu.dot_dimension_numbers<[1], [0], [0], [1], [0, 0, 1, 1], [], []>} : vector<2x32xf32>, vector<32x128xf32>, vector<2x128xf32> -> vector<2x128xf32>
    %141 = arith.addf %139, %140 : vector<2x128xf32>
    %142 = arith.negf %141 : vector<2x128xf32>
    %143 = math.exp %142 : vector<2x128xf32>
    %cst_48 = arith.constant 1.000000e+00 : f32
    %144 = vector.broadcast %cst_48 : f32 to vector<2x128xf32>
    %145 = arith.addf %144, %143 : vector<2x128xf32>
    %146 = arith.divf %144, %145 : vector<2x128xf32>
    %147 = vector.extract_strided_slice %146 {offsets = [0, 0], sizes = [2, 32], strides = [1, 1]} : vector<2x128xf32> to vector<2x32xf32>
    %148 = vector.extract_strided_slice %146 {offsets = [0, 32], sizes = [2, 32], strides = [1, 1]} : vector<2x128xf32> to vector<2x32xf32>
    %149 = vector.extract_strided_slice %146 {offsets = [0, 64], sizes = [2, 32], strides = [1, 1]} : vector<2x128xf32> to vector<2x32xf32>
    %150 = vector.extract_strided_slice %146 {offsets = [0, 96], sizes = [2, 32], strides = [1, 1]} : vector<2x128xf32> to vector<2x32xf32>
    %cst_49 = arith.constant 2.000000e+00 : f32
    %151 = vector.broadcast %cst_49 : f32 to vector<2x32xf32>
    %152 = arith.mulf %151, %150 : vector<2x32xf32>
    %cst_50 = arith.constant 1.000000e+00 : f32
    %153 = vector.broadcast %cst_50 : f32 to vector<2x32xf32>
    %154 = arith.subf %152, %153 : vector<2x32xf32>
    %155 = arith.mulf %148, %135 : vector<2x32xf32>
    %156 = arith.mulf %147, %154 : vector<2x32xf32>
    %157 = arith.addf %155, %156 : vector<2x32xf32>
    %158 = math.tanh %157 : vector<2x32xf32>
    %159 = arith.mulf %149, %158 : vector<2x32xf32>
    %c7 = arith.constant 7 : index
    %c0_51 = arith.constant 0 : index
    %c0_52 = arith.constant 0 : index
    %160 = vector.load %arg1[%c7, %c0_51, %c0_52] : memref<8x2x128xf32, #tpu.memory_space<vmem>>, vector<1x2x128xf32>
    %161 = vector.shape_cast %160 : vector<1x2x128xf32> to vector<2x128xf32>
    %cst_53 = arith.constant dense<0.000000e+00> : vector<2x128xf32>
    %162 = tpu.matmul %159, %0, %cst_53 {dimension_numbers = #tpu.dot_dimension_numbers<[1], [0], [0], [1], [0, 0, 1, 1], [], []>} : vector<2x32xf32>, vector<32x128xf32>, vector<2x128xf32> -> vector<2x128xf32>
    %163 = arith.addf %161, %162 : vector<2x128xf32>
    %164 = arith.negf %163 : vector<2x128xf32>
    %165 = math.exp %164 : vector<2x128xf32>
    %cst_54 = arith.constant 1.000000e+00 : f32
    %166 = vector.broadcast %cst_54 : f32 to vector<2x128xf32>
    %167 = arith.addf %166, %165 : vector<2x128xf32>
    %168 = arith.divf %166, %167 : vector<2x128xf32>
    %169 = vector.extract_strided_slice %168 {offsets = [0, 0], sizes = [2, 32], strides = [1, 1]} : vector<2x128xf32> to vector<2x32xf32>
    %170 = vector.extract_strided_slice %168 {offsets = [0, 32], sizes = [2, 32], strides = [1, 1]} : vector<2x128xf32> to vector<2x32xf32>
    %171 = vector.extract_strided_slice %168 {offsets = [0, 64], sizes = [2, 32], strides = [1, 1]} : vector<2x128xf32> to vector<2x32xf32>
    %172 = vector.extract_strided_slice %168 {offsets = [0, 96], sizes = [2, 32], strides = [1, 1]} : vector<2x128xf32> to vector<2x32xf32>
    %cst_55 = arith.constant 2.000000e+00 : f32
    %173 = vector.broadcast %cst_55 : f32 to vector<2x32xf32>
    %174 = arith.mulf %173, %172 : vector<2x32xf32>
    %cst_56 = arith.constant 1.000000e+00 : f32
    %175 = vector.broadcast %cst_56 : f32 to vector<2x32xf32>
    %176 = arith.subf %174, %175 : vector<2x32xf32>
    %177 = arith.mulf %170, %157 : vector<2x32xf32>
    %178 = arith.mulf %169, %176 : vector<2x32xf32>
    %179 = arith.addf %177, %178 : vector<2x32xf32>
    %180 = math.tanh %179 : vector<2x32xf32>
    %181 = arith.mulf %171, %180 : vector<2x32xf32>
    %cst_57 = arith.constant dense<0.000000e+00> : vector<2x64xf32>
    %182 = tpu.matmul %181, %1, %cst_57 {dimension_numbers = #tpu.dot_dimension_numbers<[1], [0], [0], [1], [0, 0, 1, 1], [], []>} : vector<2x32xf32>, vector<32x64xf32>, vector<2x64xf32> -> vector<2x64xf32>
    %183 = vector.broadcast %3 : vector<1x64xf32> to vector<2x64xf32>
    %184 = arith.addf %182, %183 : vector<2x64xf32>
    %cst_58 = arith.constant 0.000000e+00 : f32
    %185 = vector.broadcast %cst_58 : f32 to vector<2x16xf32>
    %cst_59 = arith.constant 0.000000e+00 : f32
    %186 = vector.broadcast %cst_59 : f32 to vector<2x16xf32>
    %cst_60 = arith.constant dense<0.000000e+00> : vector<2x64xf32>
    %187 = tpu.matmul %185, %2, %cst_60 {dimension_numbers = #tpu.dot_dimension_numbers<[1], [0], [0], [1], [0, 0, 1, 1], [], []>} : vector<2x16xf32>, vector<16x64xf32>, vector<2x64xf32> -> vector<2x64xf32>
    %188 = arith.addf %184, %187 : vector<2x64xf32>
    %189 = arith.negf %188 : vector<2x64xf32>
    %190 = math.exp %189 : vector<2x64xf32>
    %cst_61 = arith.constant 1.000000e+00 : f32
    %191 = vector.broadcast %cst_61 : f32 to vector<2x64xf32>
    %192 = arith.addf %191, %190 : vector<2x64xf32>
    %193 = arith.divf %191, %192 : vector<2x64xf32>
    %194 = vector.extract_strided_slice %193 {offsets = [0, 0], sizes = [2, 16], strides = [1, 1]} : vector<2x64xf32> to vector<2x16xf32>
    %195 = vector.extract_strided_slice %193 {offsets = [0, 16], sizes = [2, 16], strides = [1, 1]} : vector<2x64xf32> to vector<2x16xf32>
    %196 = vector.extract_strided_slice %193 {offsets = [0, 32], sizes = [2, 16], strides = [1, 1]} : vector<2x64xf32> to vector<2x16xf32>
    %197 = vector.extract_strided_slice %193 {offsets = [0, 48], sizes = [2, 16], strides = [1, 1]} : vector<2x64xf32> to vector<2x16xf32>
    %cst_62 = arith.constant 2.000000e+00 : f32
    %198 = vector.broadcast %cst_62 : f32 to vector<2x16xf32>
    %199 = arith.mulf %198, %197 : vector<2x16xf32>
    %cst_63 = arith.constant 1.000000e+00 : f32
    %200 = vector.broadcast %cst_63 : f32 to vector<2x16xf32>
    %201 = arith.subf %199, %200 : vector<2x16xf32>
    %202 = arith.mulf %195, %186 : vector<2x16xf32>
    %203 = arith.mulf %194, %201 : vector<2x16xf32>
    %204 = arith.addf %202, %203 : vector<2x16xf32>
    %205 = math.tanh %204 : vector<2x16xf32>
    %206 = arith.mulf %196, %205 : vector<2x16xf32>
    %c0_64 = arith.constant 0 : index
    %c0_65 = arith.constant 0 : index
    %207 = vector.load %arg6[%c0_64, %c0_65] : memref<2x128xf32, #tpu.memory_space<vmem>>, vector<2x16xf32>
    tpu.vector_store %arg6[%c0_64, %c0_65], %206 {strides = array<i32>} : memref<2x128xf32, #tpu.memory_space<vmem>>, vector<2x16xf32>,
    %cst_66 = arith.constant dense<0.000000e+00> : vector<2x64xf32>
    %208 = tpu.matmul %206, %2, %cst_66 {dimension_numbers = #tpu.dot_dimension_numbers<[1], [0], [0], [1], [0, 0, 1, 1], [], []>} : vector<2x16xf32>, vector<16x64xf32>, vector<2x64xf32> -> vector<2x64xf32>
    %209 = arith.addf %184, %208 : vector<2x64xf32>
    %210 = arith.negf %209 : vector<2x64xf32>
    %211 = math.exp %210 : vector<2x64xf32>
    %cst_67 = arith.constant 1.000000e+00 : f32
    %212 = vector.broadcast %cst_67 : f32 to vector<2x64xf32>
    %213 = arith.addf %212, %211 : vector<2x64xf32>
    %214 = arith.divf %212, %213 : vector<2x64xf32>
    %215 = vector.extract_strided_slice %214 {offsets = [0, 0], sizes = [2, 16], strides = [1, 1]} : vector<2x64xf32> to vector<2x16xf32>
    %216 = vector.extract_strided_slice %214 {offsets = [0, 16], sizes = [2, 16], strides = [1, 1]} : vector<2x64xf32> to vector<2x16xf32>
    %217 = vector.extract_strided_slice %214 {offsets = [0, 32], sizes = [2, 16], strides = [1, 1]} : vector<2x64xf32> to vector<2x16xf32>
    %218 = vector.extract_strided_slice %214 {offsets = [0, 48], sizes = [2, 16], strides = [1, 1]} : vector<2x64xf32> to vector<2x16xf32>
    %cst_68 = arith.constant 2.000000e+00 : f32
    %219 = vector.broadcast %cst_68 : f32 to vector<2x16xf32>
    %220 = arith.mulf %219, %218 : vector<2x16xf32>
    %cst_69 = arith.constant 1.000000e+00 : f32
    %221 = vector.broadcast %cst_69 : f32 to vector<2x16xf32>
    %222 = arith.subf %220, %221 : vector<2x16xf32>
    %223 = arith.mulf %216, %204 : vector<2x16xf32>
    %224 = arith.mulf %215, %222 : vector<2x16xf32>
    %225 = arith.addf %223, %224 : vector<2x16xf32>
    %226 = math.tanh %225 : vector<2x16xf32>
    %227 = arith.mulf %217, %226 : vector<2x16xf32>
    %c0_70 = arith.constant 0 : index
    %c16 = arith.constant 16 : index
    %228 = vector.load %arg6[%c0_70, %c16] : memref<2x128xf32, #tpu.memory_space<vmem>>, vector<2x16xf32>
    tpu.vector_store %arg6[%c0_70, %c16], %227 {strides = array<i32>} : memref<2x128xf32, #tpu.memory_space<vmem>>, vector<2x16xf32>,
    %cst_71 = arith.constant dense<0.000000e+00> : vector<2x64xf32>
    %229 = tpu.matmul %227, %2, %cst_71 {dimension_numbers = #tpu.dot_dimension_numbers<[1], [0], [0], [1], [0, 0, 1, 1], [], []>} : vector<2x16xf32>, vector<16x64xf32>, vector<2x64xf32> -> vector<2x64xf32>
    %230 = arith.addf %184, %229 : vector<2x64xf32>
    %231 = arith.negf %230 : vector<2x64xf32>
    %232 = math.exp %231 : vector<2x64xf32>
    %cst_72 = arith.constant 1.000000e+00 : f32
    %233 = vector.broadcast %cst_72 : f32 to vector<2x64xf32>
    %234 = arith.addf %233, %232 : vector<2x64xf32>
    %235 = arith.divf %233, %234 : vector<2x64xf32>
    %236 = vector.extract_strided_slice %235 {offsets = [0, 0], sizes = [2, 16], strides = [1, 1]} : vector<2x64xf32> to vector<2x16xf32>
    %237 = vector.extract_strided_slice %235 {offsets = [0, 16], sizes = [2, 16], strides = [1, 1]} : vector<2x64xf32> to vector<2x16xf32>
    %238 = vector.extract_strided_slice %235 {offsets = [0, 32], sizes = [2, 16], strides = [1, 1]} : vector<2x64xf32> to vector<2x16xf32>
    %239 = vector.extract_strided_slice %235 {offsets = [0, 48], sizes = [2, 16], strides = [1, 1]} : vector<2x64xf32> to vector<2x16xf32>
    %cst_73 = arith.constant 2.000000e+00 : f32
    %240 = vector.broadcast %cst_73 : f32 to vector<2x16xf32>
    %241 = arith.mulf %240, %239 : vector<2x16xf32>
    %cst_74 = arith.constant 1.000000e+00 : f32
    %242 = vector.broadcast %cst_74 : f32 to vector<2x16xf32>
    %243 = arith.subf %241, %242 : vector<2x16xf32>
    %244 = arith.mulf %237, %225 : vector<2x16xf32>
    %245 = arith.mulf %236, %243 : vector<2x16xf32>
    %246 = arith.addf %244, %245 : vector<2x16xf32>
    %247 = math.tanh %246 : vector<2x16xf32>
    %248 = arith.mulf %238, %247 : vector<2x16xf32>
    %c0_75 = arith.constant 0 : index
    %c32 = arith.constant 32 : index
    %249 = vector.load %arg6[%c0_75, %c32] : memref<2x128xf32, #tpu.memory_space<vmem>>, vector<2x16xf32>
    tpu.vector_store %arg6[%c0_75, %c32], %248 {strides = array<i32>} : memref<2x128xf32, #tpu.memory_space<vmem>>, vector<2x16xf32>,
    %cst_76 = arith.constant dense<0.000000e+00> : vector<2x64xf32>
    %250 = tpu.matmul %248, %2, %cst_76 {dimension_numbers = #tpu.dot_dimension_numbers<[1], [0], [0], [1], [0, 0, 1, 1], [], []>} : vector<2x16xf32>, vector<16x64xf32>, vector<2x64xf32> -> vector<2x64xf32>
    %251 = arith.addf %184, %250 : vector<2x64xf32>
    %252 = arith.negf %251 : vector<2x64xf32>
    %253 = math.exp %252 : vector<2x64xf32>
    %cst_77 = arith.constant 1.000000e+00 : f32
    %254 = vector.broadcast %cst_77 : f32 to vector<2x64xf32>
    %255 = arith.addf %254, %253 : vector<2x64xf32>
    %256 = arith.divf %254, %255 : vector<2x64xf32>
    %257 = vector.extract_strided_slice %256 {offsets = [0, 0], sizes = [2, 16], strides = [1, 1]} : vector<2x64xf32> to vector<2x16xf32>
    %258 = vector.extract_strided_slice %256 {offsets = [0, 16], sizes = [2, 16], strides = [1, 1]} : vector<2x64xf32> to vector<2x16xf32>
    %259 = vector.extract_strided_slice %256 {offsets = [0, 32], sizes = [2, 16], strides = [1, 1]} : vector<2x64xf32> to vector<2x16xf32>
    %260 = vector.extract_strided_slice %256 {offsets = [0, 48], sizes = [2, 16], strides = [1, 1]} : vector<2x64xf32> to vector<2x16xf32>
    %cst_78 = arith.constant 2.000000e+00 : f32
    %261 = vector.broadcast %cst_78 : f32 to vector<2x16xf32>
    %262 = arith.mulf %261, %260 : vector<2x16xf32>
    %cst_79 = arith.constant 1.000000e+00 : f32
    %263 = vector.broadcast %cst_79 : f32 to vector<2x16xf32>
    %264 = arith.subf %262, %263 : vector<2x16xf32>
    %265 = arith.mulf %258, %246 : vector<2x16xf32>
    %266 = arith.mulf %257, %264 : vector<2x16xf32>
    %267 = arith.addf %265, %266 : vector<2x16xf32>
    %268 = math.tanh %267 : vector<2x16xf32>
    %269 = arith.mulf %259, %268 : vector<2x16xf32>
    %c0_80 = arith.constant 0 : index
    %c48 = arith.constant 48 : index
    %270 = vector.load %arg6[%c0_80, %c48] : memref<2x128xf32, #tpu.memory_space<vmem>>, vector<2x16xf32>
    tpu.vector_store %arg6[%c0_80, %c48], %269 {strides = array<i32>} : memref<2x128xf32, #tpu.memory_space<vmem>>, vector<2x16xf32>,
    %cst_81 = arith.constant dense<0.000000e+00> : vector<2x64xf32>
    %271 = tpu.matmul %269, %2, %cst_81 {dimension_numbers = #tpu.dot_dimension_numbers<[1], [0], [0], [1], [0, 0, 1, 1], [], []>} : vector<2x16xf32>, vector<16x64xf32>, vector<2x64xf32> -> vector<2x64xf32>
    %272 = arith.addf %184, %271 : vector<2x64xf32>
    %273 = arith.negf %272 : vector<2x64xf32>
    %274 = math.exp %273 : vector<2x64xf32>
    %cst_82 = arith.constant 1.000000e+00 : f32
    %275 = vector.broadcast %cst_82 : f32 to vector<2x64xf32>
    %276 = arith.addf %275, %274 : vector<2x64xf32>
    %277 = arith.divf %275, %276 : vector<2x64xf32>
    %278 = vector.extract_strided_slice %277 {offsets = [0, 0], sizes = [2, 16], strides = [1, 1]} : vector<2x64xf32> to vector<2x16xf32>
    %279 = vector.extract_strided_slice %277 {offsets = [0, 16], sizes = [2, 16], strides = [1, 1]} : vector<2x64xf32> to vector<2x16xf32>
    %280 = vector.extract_strided_slice %277 {offsets = [0, 32], sizes = [2, 16], strides = [1, 1]} : vector<2x64xf32> to vector<2x16xf32>
    %281 = vector.extract_strided_slice %277 {offsets = [0, 48], sizes = [2, 16], strides = [1, 1]} : vector<2x64xf32> to vector<2x16xf32>
    %cst_83 = arith.constant 2.000000e+00 : f32
    %282 = vector.broadcast %cst_83 : f32 to vector<2x16xf32>
    %283 = arith.mulf %282, %281 : vector<2x16xf32>
    %cst_84 = arith.constant 1.000000e+00 : f32
    %284 = vector.broadcast %cst_84 : f32 to vector<2x16xf32>
    %285 = arith.subf %283, %284 : vector<2x16xf32>
    %286 = arith.mulf %279, %267 : vector<2x16xf32>
    %287 = arith.mulf %278, %285 : vector<2x16xf32>
    %288 = arith.addf %286, %287 : vector<2x16xf32>
    %289 = math.tanh %288 : vector<2x16xf32>
    %290 = arith.mulf %280, %289 : vector<2x16xf32>
    %c0_85 = arith.constant 0 : index
    %c64 = arith.constant 64 : index
    %291 = vector.load %arg6[%c0_85, %c64] : memref<2x128xf32, #tpu.memory_space<vmem>>, vector<2x16xf32>
    tpu.vector_store %arg6[%c0_85, %c64], %290 {strides = array<i32>} : memref<2x128xf32, #tpu.memory_space<vmem>>, vector<2x16xf32>,
    %cst_86 = arith.constant dense<0.000000e+00> : vector<2x64xf32>
    %292 = tpu.matmul %290, %2, %cst_86 {dimension_numbers = #tpu.dot_dimension_numbers<[1], [0], [0], [1], [0, 0, 1, 1], [], []>} : vector<2x16xf32>, vector<16x64xf32>, vector<2x64xf32> -> vector<2x64xf32>
    %293 = arith.addf %184, %292 : vector<2x64xf32>
    %294 = arith.negf %293 : vector<2x64xf32>
    %295 = math.exp %294 : vector<2x64xf32>
    %cst_87 = arith.constant 1.000000e+00 : f32
    %296 = vector.broadcast %cst_87 : f32 to vector<2x64xf32>
    %297 = arith.addf %296, %295 : vector<2x64xf32>
    %298 = arith.divf %296, %297 : vector<2x64xf32>
    %299 = vector.extract_strided_slice %298 {offsets = [0, 0], sizes = [2, 16], strides = [1, 1]} : vector<2x64xf32> to vector<2x16xf32>
    %300 = vector.extract_strided_slice %298 {offsets = [0, 16], sizes = [2, 16], strides = [1, 1]} : vector<2x64xf32> to vector<2x16xf32>
    %301 = vector.extract_strided_slice %298 {offsets = [0, 32], sizes = [2, 16], strides = [1, 1]} : vector<2x64xf32> to vector<2x16xf32>
    %302 = vector.extract_strided_slice %298 {offsets = [0, 48], sizes = [2, 16], strides = [1, 1]} : vector<2x64xf32> to vector<2x16xf32>
    %cst_88 = arith.constant 2.000000e+00 : f32
    %303 = vector.broadcast %cst_88 : f32 to vector<2x16xf32>
    %304 = arith.mulf %303, %302 : vector<2x16xf32>
    %cst_89 = arith.constant 1.000000e+00 : f32
    %305 = vector.broadcast %cst_89 : f32 to vector<2x16xf32>
    %306 = arith.subf %304, %305 : vector<2x16xf32>
    %307 = arith.mulf %300, %288 : vector<2x16xf32>
    %308 = arith.mulf %299, %306 : vector<2x16xf32>
    %309 = arith.addf %307, %308 : vector<2x16xf32>
    %310 = math.tanh %309 : vector<2x16xf32>
    %311 = arith.mulf %301, %310 : vector<2x16xf32>
    %c0_90 = arith.constant 0 : index
    %c80 = arith.constant 80 : index
    %312 = vector.load %arg6[%c0_90, %c80] : memref<2x128xf32, #tpu.memory_space<vmem>>, vector<2x16xf32>
    tpu.vector_store %arg6[%c0_90, %c80], %311 {strides = array<i32>} : memref<2x128xf32, #tpu.memory_space<vmem>>, vector<2x16xf32>,
    %cst_91 = arith.constant dense<0.000000e+00> : vector<2x64xf32>
    %313 = tpu.matmul %311, %2, %cst_91 {dimension_numbers = #tpu.dot_dimension_numbers<[1], [0], [0], [1], [0, 0, 1, 1], [], []>} : vector<2x16xf32>, vector<16x64xf32>, vector<2x64xf32> -> vector<2x64xf32>
    %314 = arith.addf %184, %313 : vector<2x64xf32>
    %315 = arith.negf %314 : vector<2x64xf32>
    %316 = math.exp %315 : vector<2x64xf32>
    %cst_92 = arith.constant 1.000000e+00 : f32
    %317 = vector.broadcast %cst_92 : f32 to vector<2x64xf32>
    %318 = arith.addf %317, %316 : vector<2x64xf32>
    %319 = arith.divf %317, %318 : vector<2x64xf32>
    %320 = vector.extract_strided_slice %319 {offsets = [0, 0], sizes = [2, 16], strides = [1, 1]} : vector<2x64xf32> to vector<2x16xf32>
    %321 = vector.extract_strided_slice %319 {offsets = [0, 16], sizes = [2, 16], strides = [1, 1]} : vector<2x64xf32> to vector<2x16xf32>
    %322 = vector.extract_strided_slice %319 {offsets = [0, 32], sizes = [2, 16], strides = [1, 1]} : vector<2x64xf32> to vector<2x16xf32>
    %323 = vector.extract_strided_slice %319 {offsets = [0, 48], sizes = [2, 16], strides = [1, 1]} : vector<2x64xf32> to vector<2x16xf32>
    %cst_93 = arith.constant 2.000000e+00 : f32
    %324 = vector.broadcast %cst_93 : f32 to vector<2x16xf32>
    %325 = arith.mulf %324, %323 : vector<2x16xf32>
    %cst_94 = arith.constant 1.000000e+00 : f32
    %326 = vector.broadcast %cst_94 : f32 to vector<2x16xf32>
    %327 = arith.subf %325, %326 : vector<2x16xf32>
    %328 = arith.mulf %321, %309 : vector<2x16xf32>
    %329 = arith.mulf %320, %327 : vector<2x16xf32>
    %330 = arith.addf %328, %329 : vector<2x16xf32>
    %331 = math.tanh %330 : vector<2x16xf32>
    %332 = arith.mulf %322, %331 : vector<2x16xf32>
    %c0_95 = arith.constant 0 : index
    %c96 = arith.constant 96 : index
    %333 = vector.load %arg6[%c0_95, %c96] : memref<2x128xf32, #tpu.memory_space<vmem>>, vector<2x16xf32>
    tpu.vector_store %arg6[%c0_95, %c96], %332 {strides = array<i32>} : memref<2x128xf32, #tpu.memory_space<vmem>>, vector<2x16xf32>,
    %cst_96 = arith.constant dense<0.000000e+00> : vector<2x64xf32>
    %334 = tpu.matmul %332, %2, %cst_96 {dimension_numbers = #tpu.dot_dimension_numbers<[1], [0], [0], [1], [0, 0, 1, 1], [], []>} : vector<2x16xf32>, vector<16x64xf32>, vector<2x64xf32> -> vector<2x64xf32>
    %335 = arith.addf %184, %334 : vector<2x64xf32>
    %336 = arith.negf %335 : vector<2x64xf32>
    %337 = math.exp %336 : vector<2x64xf32>
    %cst_97 = arith.constant 1.000000e+00 : f32
    %338 = vector.broadcast %cst_97 : f32 to vector<2x64xf32>
    %339 = arith.addf %338, %337 : vector<2x64xf32>
    %340 = arith.divf %338, %339 : vector<2x64xf32>
    %341 = vector.extract_strided_slice %340 {offsets = [0, 0], sizes = [2, 16], strides = [1, 1]} : vector<2x64xf32> to vector<2x16xf32>
    %342 = vector.extract_strided_slice %340 {offsets = [0, 16], sizes = [2, 16], strides = [1, 1]} : vector<2x64xf32> to vector<2x16xf32>
    %343 = vector.extract_strided_slice %340 {offsets = [0, 32], sizes = [2, 16], strides = [1, 1]} : vector<2x64xf32> to vector<2x16xf32>
    %344 = vector.extract_strided_slice %340 {offsets = [0, 48], sizes = [2, 16], strides = [1, 1]} : vector<2x64xf32> to vector<2x16xf32>
    %cst_98 = arith.constant 2.000000e+00 : f32
    %345 = vector.broadcast %cst_98 : f32 to vector<2x16xf32>
    %346 = arith.mulf %345, %344 : vector<2x16xf32>
    %cst_99 = arith.constant 1.000000e+00 : f32
    %347 = vector.broadcast %cst_99 : f32 to vector<2x16xf32>
    %348 = arith.subf %346, %347 : vector<2x16xf32>
    %349 = arith.mulf %342, %330 : vector<2x16xf32>
    %350 = arith.mulf %341, %348 : vector<2x16xf32>
    %351 = arith.addf %349, %350 : vector<2x16xf32>
    %352 = math.tanh %351 : vector<2x16xf32>
    %353 = arith.mulf %343, %352 : vector<2x16xf32>
    %c0_100 = arith.constant 0 : index
    %c112 = arith.constant 112 : index
    %354 = vector.load %arg6[%c0_100, %c112] : memref<2x128xf32, #tpu.memory_space<vmem>>, vector<2x16xf32>
    tpu.vector_store %arg6[%c0_100, %c112], %353 {strides = array<i32>} : memref<2x128xf32, #tpu.memory_space<vmem>>, vector<2x16xf32>,
    return
  }
  func.func @transform_0(%arg0: i32) -> (i32, i32, i32) {
    %c0_i32 = arith.constant 0 : i32
    %c0_i32_0 = arith.constant 0 : i32
    %c0_i32_1 = arith.constant 0 : i32
    return %c0_i32, %arg0, %c0_i32_0 : i32, i32, i32
  }
  func.func @transform_1(%arg0: i32) -> (i32, i32) {
    %c0_i32 = arith.constant 0 : i32
    %c0_i32_0 = arith.constant 0 : i32
    %c0_i32_1 = arith.constant 0 : i32
    return %c0_i32, %c0_i32_0 : i32, i32
  }
  func.func @transform_2(%arg0: i32) -> (i32, i32) {
    %c0_i32 = arith.constant 0 : i32
    %c0_i32_0 = arith.constant 0 : i32
    %c0_i32_1 = arith.constant 0 : i32
    return %c0_i32, %c0_i32_0 : i32, i32
  }
  func.func @transform_3(%arg0: i32) -> (i32, i32) {
    %c0_i32 = arith.constant 0 : i32
    %c0_i32_0 = arith.constant 0 : i32
    %c0_i32_1 = arith.constant 0 : i32
    return %c0_i32, %c0_i32_0 : i32, i32
  }
  func.func @transform_4(%arg0: i32) -> (i32, i32) {
    %c0_i32 = arith.constant 0 : i32
    %c0_i32_0 = arith.constant 0 : i32
    %c0_i32_1 = arith.constant 0 : i32
    return %c0_i32, %c0_i32_0 : i32, i32
  }
  func.func @transform_5(%arg0: i32) -> (i32, i32) {
    %c0_i32 = arith.constant 0 : i32
    %c0_i32_0 = arith.constant 0 : i32
    return %arg0, %c0_i32 : i32, i32
  }
}

</mosaic_0001>

<llo_original>
// kernel: tpu_custom_call.1
$region0: #{tpu_custom_call.1}
  #allocation0 [shape = 'u32[]', space=smem, size = 0x4, offset = 0x4, fixed_abs, tag = 'smem constant byte address 0x4 - core index']
  #allocation1 [shape = 'u32[72,128]{1,0:T(1,128)}', space=vmem, size = 0x9000, scoped, tag = 'internal scratch']
  %s0 = inlined_call_operand.hbm [shape: f32[8,2,128], index: 0, kind: input, shape index: {}]
  %s1 = inlined_call_operand.hbm [shape: f32[32,128], index: 1, kind: input, shape index: {}]
  %s2 = inlined_call_operand.hbm [shape: f32[32,64], index: 2, kind: input, shape index: {}]
  %s3 = inlined_call_operand.hbm [shape: f32[16,64], index: 3, kind: input, shape index: {}]
  %s4 = inlined_call_operand.vmem [shape: f32[1,64], index: 4, kind: input, shape index: {}]
  %s5 = inlined_call_operand.hbm [shape: f32[2,128], index: 5, kind: output, shape index: {}]
  %s6 = sld [smem:[#allocation0]]
  $region46: #{tpu_custom_call.1} parent=0
    _
  %s8 = ssub.s32 1, %s6
  %s9 = scalar_select 0, %s8, %s6
  $region1: #{tpu_custom_call.1} parent=0
    #allocation2 [shape = 'u8[8192]{0}', space=vmem, size = 0x2000, scoped, tag = 'input window, operand 0, single buffered']
    #allocation3 [shape = 's32[1]{0}', space=sflag, size = 0x4, scoped, tag = 'scoped memory for tpu_custom_call.1']
    #allocation4 [shape = 's32[1]{0}', space=sflag, size = 0x4, scoped, tag = 'scoped memory for tpu_custom_call.1']
    #allocation5 [shape = 'u8[16384]{0}', space=vmem, size = 0x4000, scoped, tag = 'input window, operand 1, single buffered']
    #allocation6 [shape = 's32[1]{0}', space=sflag, size = 0x4, scoped, tag = 'scoped memory for tpu_custom_call.1']
    #allocation7 [shape = 'u8[16384]{0}', space=vmem, size = 0x4000, scoped, tag = 'input window, operand 2, single buffered']
    #allocation8 [shape = 'u8[8192]{0}', space=vmem, size = 0x2000, scoped, tag = 'input window, operand 3, single buffered']
    #allocation9 [shape = 's32[1]{0}', space=sflag, size = 0x4, scoped, tag = 'scoped memory for tpu_custom_call.1']
    #allocation10 [shape = 'u8[1024]{0}', space=vmem, size = 0x400, scoped, tag = 'output window, operand 0, single buffered']
    %10 = vsyncpa [#allocation3], 0
    %11 = vsyncpa [#allocation6], 0
    %12 = vsyncpa [#allocation9], 0
    %13 = vsyncpa [#allocation4], 0
    // Predicated region
    $region2: #{tpu_custom_call.1} parent=1 // pred_check
      _
    $region3: #{tpu_custom_call.1} parent=1 // pred_check_branch
      %15 = sbr.rel (0) target = $region5
    $region4: #{tpu_custom_call.1} parent=1 // pred_region
      %17 = vsyncadd [#allocation3], 0
      %s18 = sshll.u32 %s0, 4
      %s19 = int_to_ptr.hbm [resolvable:$true] %s18
      %s20 = sshll.u32 [#allocation2], 4
      %s21 = int_to_ptr.vmem [resolvable:$true] %s20
      %26 = dma.hbm_to_vmem [thread:$0]  %s19, 256, %s21, [#allocation3], 32, 32, 2
    $region5: #{tpu_custom_call.1} parent=1 // pred_fallthru
      _
    // Predicated region
    $region6: #{tpu_custom_call.1} parent=1 // pred_check
      _
    $region7: #{tpu_custom_call.1} parent=1 // pred_check_branch
      %28 = sbr.rel (0) target = $region9
    $region8: #{tpu_custom_call.1} parent=1 // pred_region
      %30 = vsyncadd [#allocation6], 0
      %s31 = sshll.u32 %s1, 4
      %s32 = int_to_ptr.hbm [resolvable:$true] %s31
      %s33 = sshll.u32 [#allocation5], 4
      %s34 = int_to_ptr.vmem [resolvable:$true] %s33
      %39 = dma.hbm_to_vmem [thread:$0]  %s32, 512, %s34, [#allocation6], 128, 128, 8
    $region9: #{tpu_custom_call.1} parent=1 // pred_fallthru
      _
    // Predicated region
    $region10: #{tpu_custom_call.1} parent=1 // pred_check
      _
    $region11: #{tpu_custom_call.1} parent=1 // pred_check_branch
      %41 = sbr.rel (0) target = $region13
    $region12: #{tpu_custom_call.1} parent=1 // pred_region
      %43 = vsyncadd [#allocation6], 0
      %s44 = sshll.u32 %s2, 4
      %s45 = int_to_ptr.hbm [resolvable:$true] %s44
      %s46 = sshll.u32 [#allocation7], 4
      %s47 = int_to_ptr.vmem [resolvable:$true] %s46
      %52 = dma.hbm_to_vmem [thread:$0]  %s45, 512, %s47, [#allocation6], 128, 128, 8
    $region13: #{tpu_custom_call.1} parent=1 // pred_fallthru
      _
    // Predicated region
    $region14: #{tpu_custom_call.1} parent=1 // pred_check
      _
    $region15: #{tpu_custom_call.1} parent=1 // pred_check_branch
      %54 = sbr.rel (0) target = $region17
    $region16: #{tpu_custom_call.1} parent=1 // pred_region
      %56 = vsyncadd [#allocation9], 0
      %s57 = sshll.u32 %s3, 4
      %s58 = int_to_ptr.hbm [resolvable:$true] %s57
      %s59 = sshll.u32 [#allocation8], 4
      %s60 = int_to_ptr.vmem [resolvable:$true] %s59
      %65 = dma.hbm_to_vmem [thread:$0]  %s58, 256, %s60, [#allocation9], 128, 128, 8
    $region17: #{tpu_custom_call.1} parent=1 // pred_fallthru
      _
    // Predicated region
    $region18: #{tpu_custom_call.1} parent=1 // pred_check
      _
    $region19: #{tpu_custom_call.1} parent=1 // pred_check_branch
      %67 = sbr.rel (0) target = $region21
    $region20: #{tpu_custom_call.1} parent=1 // pred_region
      _
    $region21: #{tpu_custom_call.1} parent=1 // pred_fallthru
      _
    // Predicated region
    $region22: #{tpu_custom_call.1} parent=1 // pred_check
      _
    $region23: #{tpu_custom_call.1} parent=1 // pred_check_branch
      %69 = sbr.rel (0) target = $region25
    $region24: #{tpu_custom_call.1} parent=1 // pred_region
      %71 = dma.done [#allocation3], 256
    $region25: #{tpu_custom_call.1} parent=1 // pred_fallthru
      _
    // Predicated region
    $region26: #{tpu_custom_call.1} parent=1 // pred_check
      _
    $region27: #{tpu_custom_call.1} parent=1 // pred_check_branch
      %73 = sbr.rel (0) target = $region29
    $region28: #{tpu_custom_call.1} parent=1 // pred_region
      %75 = dma.done [#allocation6], 512
    $region29: #{tpu_custom_call.1} parent=1 // pred_fallthru
      _
    // Predicated region
    $region30: #{tpu_custom_call.1} parent=1 // pred_check
      _
    $region31: #{tpu_custom_call.1} parent=1 // pred_check_branch
      %77 = sbr.rel (0) target = $region33
    $region32: #{tpu_custom_call.1} parent=1 // pred_region
      %79 = dma.done [#allocation6], 512
    $region33: #{tpu_custom_call.1} parent=1 // pred_fallthru
      _
    // Predicated region
    $region34: #{tpu_custom_call.1} parent=1 // pred_check
      _
    $region35: #{tpu_custom_call.1} parent=1 // pred_check_branch
      %81 = sbr.rel (0) target = $region37
    $region36: #{tpu_custom_call.1} parent=1 // pred_region
      %83 = dma.done [#allocation9], 256
    $region37: #{tpu_custom_call.1} parent=1 // pred_fallthru
      _
    %v84 = vld [vmem:[#allocation5] sm:$0xff]
    %v85 = vld [vmem:[#allocation5 + $0x8] sm:$0xff]
    %v86 = vld [vmem:[#allocation5 + $0x10] sm:$0xff]
    %v87 = vld [vmem:[#allocation5 + $0x18] sm:$0xff]
    %v88 = vld [vmem:[#allocation7] sm:$0xff]
    %v89 = vld [vmem:[#allocation7 + $0x8] sm:$0xff]
    %v90 = vld [vmem:[#allocation7 + $0x10] sm:$0xff]
    %v91 = vld [vmem:[#allocation7 + $0x18] sm:$0xff]
    %v92 = vld [vmem:[#allocation8] sm:$0xff]
    %v93 = vld [vmem:[#allocation8 + $0x8] sm:$0xff]
    %v94 = vld [vmem:[%s4] sm:$0x1]
    %v95 = vld [vmem:[#allocation2] sm:$0x3]
    %vm96 = vcmask 261120
    %v98 = vsel %vm96, 0.0, 0
    %100 = vmatpush.msra.mxu0 0.0
    %101 = vmatpush.msra.mxu0 0.0
    %102 = vmatpush.msra.mxu0 0.0
    %103 = vmatpush.msra.mxu0 0.0
    %104 = vmatpush.msra.mxu0 0.0
    %105 = vmatpush.msra.mxu0 0.0
    %106 = vmatpush.msra.mxu0 0.0
    %107 = vmatpush.msra.mxu0 0.0
    %108 = vmatpush.msra.mxu0 0.0
    %109 = vmatpush.msra.mxu0 0.0
    %110 = vmatpush.msra.mxu0 0.0
    %111 = vmatpush.msra.mxu0 0.0
    %112 = vmatpush.msra.mxu0 %v87
    %113 = vmatpush.msra.mxu0 %v86
    %114 = vmatpush.msra.mxu0 %v85
    %115 = vmatpush.msra.mxu0 %v84
    %116 = vmatmul.f32.gmra.mxu0 %v98
    %v117 = vpop.f32.mrf.mxu0
    %v118 = vadd.f32 0.0, %v117
    %119 = vdwg.mxu0
    %v120 = vadd.f32 %v95, %v118
    %v121 = vxor.u32 %v120, 2147483648
    %v122 = vmul.f32 %v121, 1.442695
    %v123 = vpow.pop %v122
    %v124 = vadd.f32 %v123, 1.0
    %v125 = vrcp.pop %v124
    %v126 = vmul.f32 %v124, %v125
    %v127 = vsub.f32 1.0, %v126
    %v128 = vmul.f32 %v125, %v127
    %v129 = vadd.f32 %v125, %v128
    %vm130 = vweird.f32 %v124
    %vm131 = vweird.f32 %v125
    %vm132 = vmor %vm130, %vm131
    %v133 = vsel %vm132, %v125, %v129
    %v134 = vand.u32 2147483647, %v124
    %vm135 = vcmp.eq.f32.partialorder %v134, 8.507059e+37
    %v136 = vand.u32 %v124, 2147483648
    %v137 = vor.u32 1.1754944e-38, %v136
    %v138 = vsel %vm135, %v137, %v133
    %v139 = vmul.f32 1.0, %v138
    %v140 = vmul.f32 %v139, 2.0
    %v141 = vsub.f32 %v140, 1.0
    %v142 = vmul.f32 %v139, 0.0
    %144 = vrot.lane.b32.xlu0 %v141, 32
    %v145 = vpop.permute.xlu0 %144
    %v147 = vmul.f32 %v139, %v145
    %149 = vrot.lane.b32.xlu0 %v147, 32
    %v150 = vpop.permute.xlu0 %149
    %v152 = vadd.f32 %v142, %v150
    %v153 = vtanh.pop %v152
    %155 = vrot.lane.b32.xlu0 %v153, 32
    %v156 = vpop.permute.xlu0 %155
    %v158 = vmul.f32 %v139, %v156
    %s159 = scalar_lea.vmem [#allocation2], 2
    %v160 = vld [vmem:[%s159] sm:$0x3]
    %162 = vrot.lane.b32.xlu0 %v158, 64
    %v163 = vpop.permute.xlu0 %162
    %v164 = vsel %vm96, %v163, 0
    %166 = vmatpush.msra.mxu0 0.0
    %167 = vmatpush.msra.mxu0 0.0
    %168 = vmatpush.msra.mxu0 0.0
    %169 = vmatpush.msra.mxu0 0.0
    %170 = vmatpush.msra.mxu0 0.0
    %171 = vmatpush.msra.mxu0 0.0
    %172 = vmatpush.msra.mxu0 0.0
    %173 = vmatpush.msra.mxu0 0.0
    %174 = vmatpush.msra.mxu0 0.0
    %175 = vmatpush.msra.mxu0 0.0
    %176 = vmatpush.msra.mxu0 0.0
    %177 = vmatpush.msra.mxu0 0.0
    %178 = vmatpush.msra.mxu0 %v87
    %179 = vmatpush.msra.mxu0 %v86
    %180 = vmatpush.msra.mxu0 %v85
    %181 = vmatpush.msra.mxu0 %v84
    %182 = vmatmul.f32.gmra.mxu0 %v164
    %v183 = vpop.f32.mrf.mxu0
    %v184 = vadd.f32 0.0, %v183
    %185 = vdwg.mxu0
    %v186 = vadd.f32 %v160, %v184
    %v187 = vxor.u32 %v186, 2147483648
    %v188 = vmul.f32 %v187, 1.442695
    %v189 = vpow.pop %v188
    %v190 = vadd.f32 %v189, 1.0
    %v191 = vrcp.pop %v190
    %v192 = vmul.f32 %v190, %v191
    %v193 = vsub.f32 1.0, %v192
    %v194 = vmul.f32 %v191, %v193
    %v195 = vadd.f32 %v191, %v194
    %vm196 = vweird.f32 %v190
    %vm197 = vweird.f32 %v191
    %vm198 = vmor %vm196, %vm197
    %v199 = vsel %vm198, %v191, %v195
    %v200 = vand.u32 2147483647, %v190
    %vm201 = vcmp.eq.f32.partialorder %v200, 8.507059e+37
    %v202 = vand.u32 %v190, 2147483648
    %v203 = vor.u32 1.1754944e-38, %v202
    %v204 = vsel %vm201, %v203, %v199
    %v205 = vmul.f32 1.0, %v204
    %v206 = vmul.f32 %v205, 2.0
    %v207 = vsub.f32 %v206, 1.0
    %v208 = vmul.f32 %v205, %v152
    %210 = vrot.lane.b32.xlu0 %v207, 32
    %v211 = vpop.permute.xlu0 %210
    %v213 = vmul.f32 %v205, %v211
    %215 = vrot.lane.b32.xlu0 %v213, 32
    %v216 = vpop.permute.xlu0 %215
    %v218 = vadd.f32 %v208, %v216
    %v219 = vtanh.pop %v218
    %221 = vrot.lane.b32.xlu0 %v219, 32
    %v222 = vpop.permute.xlu0 %221
    %v224 = vmul.f32 %v205, %v222
    %s225 = scalar_lea.vmem [#allocation2], 4
    %v226 = vld [vmem:[%s225] sm:$0x3]
    %228 = vrot.lane.b32.xlu0 %v224, 64
    %v229 = vpop.permute.xlu0 %228
    %v230 = vsel %vm96, %v229, 0
    %232 = vmatpush.msra.mxu0 0.0
    %233 = vmatpush.msra.mxu0 0.0
    %234 = vmatpush.msra.mxu0 0.0
    %235 = vmatpush.msra.mxu0 0.0
    %236 = vmatpush.msra.mxu0 0.0
    %237 = vmatpush.msra.mxu0 0.0
    %238 = vmatpush.msra.mxu0 0.0
    %239 = vmatpush.msra.mxu0 0.0
    %240 = vmatpush.msra.mxu0 0.0
    %241 = vmatpush.msra.mxu0 0.0
    %242 = vmatpush.msra.mxu0 0.0
    %243 = vmatpush.msra.mxu0 0.0
    %244 = vmatpush.msra.mxu0 %v87
    %245 = vmatpush.msra.mxu0 %v86
    %246 = vmatpush.msra.mxu0 %v85
    %247 = vmatpush.msra.mxu0 %v84
    %248 = vmatmul.f32.gmra.mxu0 %v230
    %v249 = vpop.f32.mrf.mxu0
    %v250 = vadd.f32 0.0, %v249
    %251 = vdwg.mxu0
    %v252 = vadd.f32 %v226, %v250
    %v253 = vxor.u32 %v252, 2147483648
    %v254 = vmul.f32 %v253, 1.442695
    %v255 = vpow.pop %v254
    %v256 = vadd.f32 %v255, 1.0
    %v257 = vrcp.pop %v256
    %v258 = vmul.f32 %v256, %v257
    %v259 = vsub.f32 1.0, %v258
    %v260 = vmul.f32 %v257, %v259
    %v261 = vadd.f32 %v257, %v260
    %vm262 = vweird.f32 %v256
    %vm263 = vweird.f32 %v257
    %vm264 = vmor %vm262, %vm263
    %v265 = vsel %vm264, %v257, %v261
    %v266 = vand.u32 2147483647, %v256
    %vm267 = vcmp.eq.f32.partialorder %v266, 8.507059e+37
    %v268 = vand.u32 %v256, 2147483648
    %v269 = vor.u32 1.1754944e-38, %v268
    %v270 = vsel %vm267, %v269, %v265
    %v271 = vmul.f32 1.0, %v270
    %v272 = vmul.f32 %v271, 2.0
    %v273 = vsub.f32 %v272, 1.0
    %v274 = vmul.f32 %v271, %v218
    %276 = vrot.lane.b32.xlu0 %v273, 32
    %v277 = vpop.permute.xlu0 %276
    %v279 = vmul.f32 %v271, %v277
    %281 = vrot.lane.b32.xlu0 %v279, 32
    %v282 = vpop.permute.xlu0 %281
    %v284 = vadd.f32 %v274, %v282
    %v285 = vtanh.pop %v284
    %287 = vrot.lane.b32.xlu0 %v285, 32
    %v288 = vpop.permute.xlu0 %287
    %v290 = vmul.f32 %v271, %v288
    %s291 = scalar_lea.vmem [#allocation2], 6
    %v292 = vld [vmem:[%s291] sm:$0x3]
    %294 = vrot.lane.b32.xlu0 %v290, 64
    %v295 = vpop.permute.xlu0 %294
    %v296 = vsel %vm96, %v295, 0
    %298 = vmatpush.msra.mxu0 0.0
    %299 = vmatpush.msra.mxu0 0.0
    %300 = vmatpush.msra.mxu0 0.0
    %301 = vmatpush.msra.mxu0 0.0
    %302 = vmatpush.msra.mxu0 0.0
    %303 = vmatpush.msra.mxu0 0.0
    %304 = vmatpush.msra.mxu0 0.0
    %305 = vmatpush.msra.mxu0 0.0
    %306 = vmatpush.msra.mxu0 0.0
    %307 = vmatpush.msra.mxu0 0.0
    %308 = vmatpush.msra.mxu0 0.0
    %309 = vmatpush.msra.mxu0 0.0
    %310 = vmatpush.msra.mxu0 %v87
    %311 = vmatpush.msra.mxu0 %v86
    %312 = vmatpush.msra.mxu0 %v85
    %313 = vmatpush.msra.mxu0 %v84
    %314 = vmatmul.f32.gmra.mxu0 %v296
    %v315 = vpop.f32.mrf.mxu0
    %v316 = vadd.f32 0.0, %v315
    %317 = vdwg.mxu0
    %v318 = vadd.f32 %v292, %v316
    %v319 = vxor.u32 %v318, 2147483648
    %v320 = vmul.f32 %v319, 1.442695
    %v321 = vpow.pop %v320
    %v322 = vadd.f32 %v321, 1.0
    %v323 = vrcp.pop %v322
    %v324 = vmul.f32 %v322, %v323
    %v325 = vsub.f32 1.0, %v324
    %v326 = vmul.f32 %v323, %v325
    %v327 = vadd.f32 %v323, %v326
    %vm328 = vweird.f32 %v322
    %vm329 = vweird.f32 %v323
    %vm330 = vmor %vm328, %vm329
    %v331 = vsel %vm330, %v323, %v327
    %v332 = vand.u32 2147483647, %v322
    %vm333 = vcmp.eq.f32.partialorder %v332, 8.507059e+37
    %v334 = vand.u32 %v322, 2147483648
    %v335 = vor.u32 1.1754944e-38, %v334
    %v336 = vsel %vm333, %v335, %v331
    %v337 = vmul.f32 1.0, %v336
    %v338 = vmul.f32 %v337, 2.0
    %v339 = vsub.f32 %v338, 1.0
    %v340 = vmul.f32 %v337, %v284
    %342 = vrot.lane.b32.xlu0 %v339, 32
    %v343 = vpop.permute.xlu0 %342
    %v345 = vmul.f32 %v337, %v343
    %347 = vrot.lane.b32.xlu0 %v345, 32
    %v348 = vpop.permute.xlu0 %347
    %v350 = vadd.f32 %v340, %v348
    %v351 = vtanh.pop %v350
    %353 = vrot.lane.b32.xlu0 %v351, 32
    %v354 = vpop.permute.xlu0 %353
    %v356 = vmul.f32 %v337, %v354
    %s357 = scalar_lea.vmem [#allocation2], 8
    %v358 = vld [vmem:[%s357] sm:$0x3]
    %360 = vrot.lane.b32.xlu0 %v356, 64
    %v361 = vpop.permute.xlu0 %360
    %v362 = vsel %vm96, %v361, 0
    %364 = vmatpush.msra.mxu0 0.0
    %365 = vmatpush.msra.mxu0 0.0
    %366 = vmatpush.msra.mxu0 0.0
    %367 = vmatpush.msra.mxu0 0.0
    %368 = vmatpush.msra.mxu0 0.0
    %369 = vmatpush.msra.mxu0 0.0
    %370 = vmatpush.msra.mxu0 0.0
    %371 = vmatpush.msra.mxu0 0.0
    %372 = vmatpush.msra.mxu0 0.0
    %373 = vmatpush.msra.mxu0 0.0
    %374 = vmatpush.msra.mxu0 0.0
    %375 = vmatpush.msra.mxu0 0.0
    %376 = vmatpush.msra.mxu0 %v87
    %377 = vmatpush.msra.mxu0 %v86
    %378 = vmatpush.msra.mxu0 %v85
    %379 = vmatpush.msra.mxu0 %v84
    %380 = vmatmul.f32.gmra.mxu0 %v362
    %v381 = vpop.f32.mrf.mxu0
    %v382 = vadd.f32 0.0, %v381
    %383 = vdwg.mxu0
    %v384 = vadd.f32 %v358, %v382
    %v385 = vxor.u32 %v384, 2147483648
    %v386 = vmul.f32 %v385, 1.442695
    %v387 = vpow.pop %v386
    %v388 = vadd.f32 %v387, 1.0
    %v389 = vrcp.pop %v388
    %v390 = vmul.f32 %v388, %v389
    %v391 = vsub.f32 1.0, %v390
    %v392 = vmul.f32 %v389, %v391
    %v393 = vadd.f32 %v389, %v392
    %vm394 = vweird.f32 %v388
    %vm395 = vweird.f32 %v389
    %vm396 = vmor %vm394, %vm395
    %v397 = vsel %vm396, %v389, %v393
    %v398 = vand.u32 2147483647, %v388
    %vm399 = vcmp.eq.f32.partialorder %v398, 8.507059e+37
    %v400 = vand.u32 %v388, 2147483648
    %v401 = vor.u32 1.1754944e-38, %v400
    %v402 = vsel %vm399, %v401, %v397
    %v403 = vmul.f32 1.0, %v402
    %v404 = vmul.f32 %v403, 2.0
    %v405 = vsub.f32 %v404, 1.0
    %v406 = vmul.f32 %v403, %v350
    %408 = vrot.lane.b32.xlu0 %v405, 32
    %v409 = vpop.permute.xlu0 %408
    %v411 = vmul.f32 %v403, %v409
    %413 = vrot.lane.b32.xlu0 %v411, 32
    %v414 = vpop.permute.xlu0 %413
    %v416 = vadd.f32 %v406, %v414
    %v417 = vtanh.pop %v416
    %419 = vrot.lane.b32.xlu0 %v417, 32
    %v420 = vpop.permute.xlu0 %419
    %v422 = vmul.f32 %v403, %v420
    %s423 = scalar_lea.vmem [#allocation2], 10
    %v424 = vld [vmem:[%s423] sm:$0x3]
    %426 = vrot.lane.b32.xlu0 %v422, 64
    %v427 = vpop.permute.xlu0 %426
    %v428 = vsel %vm96, %v427, 0
    %430 = vmatpush.msra.mxu0 0.0
    %431 = vmatpush.msra.mxu0 0.0
    %432 = vmatpush.msra.mxu0 0.0
    %433 = vmatpush.msra.mxu0 0.0
    %434 = vmatpush.msra.mxu0 0.0
    %435 = vmatpush.msra.mxu0 0.0
    %436 = vmatpush.msra.mxu0 0.0
    %437 = vmatpush.msra.mxu0 0.0
    %438 = vmatpush.msra.mxu0 0.0
    %439 = vmatpush.msra.mxu0 0.0
    %440 = vmatpush.msra.mxu0 0.0
    %441 = vmatpush.msra.mxu0 0.0
    %442 = vmatpush.msra.mxu0 %v87
    %443 = vmatpush.msra.mxu0 %v86
    %444 = vmatpush.msra.mxu0 %v85
    %445 = vmatpush.msra.mxu0 %v84
    %446 = vmatmul.f32.gmra.mxu0 %v428
    %v447 = vpop.f32.mrf.mxu0
    %v448 = vadd.f32 0.0, %v447
    %449 = vdwg.mxu0
    %v450 = vadd.f32 %v424, %v448
    %v451 = vxor.u32 %v450, 2147483648
    %v452 = vmul.f32 %v451, 1.442695
    %v453 = vpow.pop %v452
    %v454 = vadd.f32 %v453, 1.0
    %v455 = vrcp.pop %v454
    %v456 = vmul.f32 %v454, %v455
    %v457 = vsub.f32 1.0, %v456
    %v458 = vmul.f32 %v455, %v457
    %v459 = vadd.f32 %v455, %v458
    %vm460 = vweird.f32 %v454
    %vm461 = vweird.f32 %v455
    %vm462 = vmor %vm460, %vm461
    %v463 = vsel %vm462, %v455, %v459
    %v464 = vand.u32 2147483647, %v454
    %vm465 = vcmp.eq.f32.partialorder %v464, 8.507059e+37
    %v466 = vand.u32 %v454, 2147483648
    %v467 = vor.u32 1.1754944e-38, %v466
    %v468 = vsel %vm465, %v467, %v463
    %v469 = vmul.f32 1.0, %v468
    %v470 = vmul.f32 %v469, 2.0
    %v471 = vsub.f32 %v470, 1.0
    %v472 = vmul.f32 %v469, %v416
    %474 = vrot.lane.b32.xlu0 %v471, 32
    %v475 = vpop.permute.xlu0 %474
    %v477 = vmul.f32 %v469, %v475
    %479 = vrot.lane.b32.xlu0 %v477, 32
    %v480 = vpop.permute.xlu0 %479
    %v482 = vadd.f32 %v472, %v480
    %v483 = vtanh.pop %v482
    %485 = vrot.lane.b32.xlu0 %v483, 32
    %v486 = vpop.permute.xlu0 %485
    %v488 = vmul.f32 %v469, %v486
    %s489 = scalar_lea.vmem [#allocation2], 12
    %v490 = vld [vmem:[%s489] sm:$0x3]
    %492 = vrot.lane.b32.xlu0 %v488, 64
    %v493 = vpop.permute.xlu0 %492
    %v494 = vsel %vm96, %v493, 0
    %496 = vmatpush.msra.mxu0 0.0
    %497 = vmatpush.msra.mxu0 0.0
    %498 = vmatpush.msra.mxu0 0.0
    %499 = vmatpush.msra.mxu0 0.0
    %500 = vmatpush.msra.mxu0 0.0
    %501 = vmatpush.msra.mxu0 0.0
    %502 = vmatpush.msra.mxu0 0.0
    %503 = vmatpush.msra.mxu0 0.0
    %504 = vmatpush.msra.mxu0 0.0
    %505 = vmatpush.msra.mxu0 0.0
    %506 = vmatpush.msra.mxu0 0.0
    %507 = vmatpush.msra.mxu0 0.0
    %508 = vmatpush.msra.mxu0 %v87
    %509 = vmatpush.msra.mxu0 %v86
    %510 = vmatpush.msra.mxu0 %v85
    %511 = vmatpush.msra.mxu0 %v84
    %512 = vmatmul.f32.gmra.mxu0 %v494
    %v513 = vpop.f32.mrf.mxu0
    %v514 = vadd.f32 0.0, %v513
    %515 = vdwg.mxu0
    %v516 = vadd.f32 %v490, %v514
    %v517 = vxor.u32 %v516, 2147483648
    %v518 = vmul.f32 %v517, 1.442695
    %v519 = vpow.pop %v518
    %v520 = vadd.f32 %v519, 1.0
    %v521 = vrcp.pop %v520
    %v522 = vmul.f32 %v520, %v521
    %v523 = vsub.f32 1.0, %v522
    %v524 = vmul.f32 %v521, %v523
    %v525 = vadd.f32 %v521, %v524
    %vm526 = vweird.f32 %v520
    %vm527 = vweird.f32 %v521
    %vm528 = vmor %vm526, %vm527
    %v529 = vsel %vm528, %v521, %v525
    %v530 = vand.u32 2147483647, %v520
    %vm531 = vcmp.eq.f32.partialorder %v530, 8.507059e+37
    %v532 = vand.u32 %v520, 2147483648
    %v533 = vor.u32 1.1754944e-38, %v532
    %v534 = vsel %vm531, %v533, %v529
    %v535 = vmul.f32 1.0, %v534
    %v536 = vmul.f32 %v535, 2.0
    %v537 = vsub.f32 %v536, 1.0
    %v538 = vmul.f32 %v535, %v482
    %540 = vrot.lane.b32.xlu0 %v537, 32
    %v541 = vpop.permute.xlu0 %540
    %v543 = vmul.f32 %v535, %v541
    %545 = vrot.lane.b32.xlu0 %v543, 32
    %v546 = vpop.permute.xlu0 %545
    %v548 = vadd.f32 %v538, %v546
    %v549 = vtanh.pop %v548
    %551 = vrot.lane.b32.xlu0 %v549, 32
    %v552 = vpop.permute.xlu0 %551
    %v554 = vmul.f32 %v535, %v552
    %s555 = scalar_lea.vmem [#allocation2], 14
    %v556 = vld [vmem:[%s555] sm:$0x3]
    %558 = vrot.lane.b32.xlu0 %v554, 64
    %v559 = vpop.permute.xlu0 %558
    %v560 = vsel %vm96, %v559, 0
    %562 = vmatpush.msra.mxu0 0.0
    %563 = vmatpush.msra.mxu0 0.0
    %564 = vmatpush.msra.mxu0 0.0
    %565 = vmatpush.msra.mxu0 0.0
    %566 = vmatpush.msra.mxu0 0.0
    %567 = vmatpush.msra.mxu0 0.0
    %568 = vmatpush.msra.mxu0 0.0
    %569 = vmatpush.msra.mxu0 0.0
    %570 = vmatpush.msra.mxu0 0.0
    %571 = vmatpush.msra.mxu0 0.0
    %572 = vmatpush.msra.mxu0 0.0
    %573 = vmatpush.msra.mxu0 0.0
    %574 = vmatpush.msra.mxu0 %v87
    %575 = vmatpush.msra.mxu0 %v86
    %576 = vmatpush.msra.mxu0 %v85
    %577 = vmatpush.msra.mxu0 %v84
    %578 = vmatmul.f32.gmra.mxu0 %v560
    %v579 = vpop.f32.mrf.mxu0
    %v580 = vadd.f32 0.0, %v579
    %581 = vdwg.mxu0
    %v582 = vadd.f32 %v556, %v580
    %v583 = vxor.u32 %v582, 2147483648
    %v584 = vmul.f32 %v583, 1.442695
    %v585 = vpow.pop %v584
    %v586 = vadd.f32 %v585, 1.0
    %v587 = vrcp.pop %v586
    %v588 = vmul.f32 %v586, %v587
    %v589 = vsub.f32 1.0, %v588
    %v590 = vmul.f32 %v587, %v589
    %v591 = vadd.f32 %v587, %v590
    %vm592 = vweird.f32 %v586
    %vm593 = vweird.f32 %v587
    %vm594 = vmor %vm592, %vm593
    %v595 = vsel %vm594, %v587, %v591
    %v596 = vand.u32 2147483647, %v586
    %vm597 = vcmp.eq.f32.partialorder %v596, 8.507059e+37
    %v598 = vand.u32 %v586, 2147483648
    %v599 = vor.u32 1.1754944e-38, %v598
    %v600 = vsel %vm597, %v599, %v595
    %v601 = vmul.f32 1.0, %v600
    %v602 = vmul.f32 %v601, 2.0
    %v603 = vsub.f32 %v602, 1.0
    %v604 = vmul.f32 %v601, %v548
    %606 = vrot.lane.b32.xlu0 %v603, 32
    %v607 = vpop.permute.xlu0 %606
    %v609 = vmul.f32 %v601, %v607
    %611 = vrot.lane.b32.xlu0 %v609, 32
    %v612 = vpop.permute.xlu0 %611
    %v614 = vadd.f32 %v604, %v612
    %v615 = vtanh.pop %v614
    %617 = vrot.lane.b32.xlu0 %v615, 32
    %v618 = vpop.permute.xlu0 %617
    %v620 = vmul.f32 %v601, %v618
    %v622 = vperm.slane %v94, 0
    %625 = vrot.lane.b32.xlu0 %v620, 64
    %v626 = vpop.permute.xlu0 %625
    %v627 = vsel %vm96, %v626, 0
    %629 = vmatpush.msra.mxu0 0.0
    %630 = vmatpush.msra.mxu0 0.0
    %631 = vmatpush.msra.mxu0 0.0
    %632 = vmatpush.msra.mxu0 0.0
    %633 = vmatpush.msra.mxu0 0.0
    %634 = vmatpush.msra.mxu0 0.0
    %635 = vmatpush.msra.mxu0 0.0
    %636 = vmatpush.msra.mxu0 0.0
    %637 = vmatpush.msra.mxu0 0.0
    %638 = vmatpush.msra.mxu0 0.0
    %639 = vmatpush.msra.mxu0 0.0
    %640 = vmatpush.msra.mxu0 0.0
    %641 = vmatpush.msra.mxu0 %v91
    %642 = vmatpush.msra.mxu0 %v90
    %643 = vmatpush.msra.mxu0 %v89
    %644 = vmatpush.msra.mxu0 %v88
    %645 = vmatmul.f32.gmra.mxu0 %v627
    %v646 = vpop.f32.mrf.mxu0
    %v647 = vadd.f32 %v622, %v646
    %648 = vdwg.mxu0
    %vm649 = vcmask 130048
    %v650 = vsel %vm649, 0.0, 0
    %652 = vmatpush.msra.mxu0 0.0
    %653 = vmatpush.msra.mxu0 0.0
    %654 = vmatpush.msra.mxu0 0.0
    %655 = vmatpush.msra.mxu0 0.0
    %656 = vmatpush.msra.mxu0 0.0
    %657 = vmatpush.msra.mxu0 0.0
    %658 = vmatpush.msra.mxu0 0.0
    %659 = vmatpush.msra.mxu0 0.0
    %660 = vmatpush.msra.mxu0 0.0
    %661 = vmatpush.msra.mxu0 0.0
    %662 = vmatpush.msra.mxu0 0.0
    %663 = vmatpush.msra.mxu0 0.0
    %664 = vmatpush.msra.mxu0 0.0
    %665 = vmatpush.msra.mxu0 0.0
    %666 = vmatpush.msra.mxu0 %v93
    %667 = vmatpush.msra.mxu0 %v92
    %668 = vmatmul.f32.gmra.mxu0 %v650
    %v669 = vpop.f32.mrf.mxu0
    %v670 = vadd.f32 0.0, %v669
    %671 = vdwg.mxu0
    %v672 = vadd.f32 %v647, %v670
    %v673 = vxor.u32 %v672, 2147483648
    %v674 = vmul.f32 %v673, 1.442695
    %v675 = vpow.pop %v674
    %v676 = vadd.f32 %v675, 1.0
    %v677 = vrcp.pop %v676
    %v678 = vmul.f32 %v676, %v677
    %v679 = vsub.f32 1.0, %v678
    %v680 = vmul.f32 %v677, %v679
    %v681 = vadd.f32 %v677, %v680
    %vm682 = vweird.f32 %v676
    %vm683 = vweird.f32 %v677
    %vm684 = vmor %vm682, %vm683
    %v685 = vsel %vm684, %v677, %v681
    %v686 = vand.u32 2147483647, %v676
    %vm687 = vcmp.eq.f32.partialorder %v686, 8.507059e+37
    %v688 = vand.u32 %v676, 2147483648
    %v689 = vor.u32 1.1754944e-38, %v688
    %v690 = vsel %vm687, %v689, %v685
    %v691 = vmul.f32 1.0, %v690
    %v692 = vmul.f32 %v691, 2.0
    %v693 = vsub.f32 %v692, 1.0
    %v694 = vmul.f32 %v691, 0.0
    %696 = vrot.lane.b32.xlu0 %v693, 80
    %v697 = vpop.permute.xlu0 %696
    %v699 = vmul.f32 %v691, %v697
    %701 = vrot.lane.b32.xlu0 %v699, 16
    %v702 = vpop.permute.xlu0 %701
    %v704 = vadd.f32 %v694, %v702
    %v705 = vtanh.pop %v704
    %707 = vrot.lane.b32.xlu0 %v705, 16
    %v708 = vpop.permute.xlu0 %707
    %v710 = vmul.f32 %v691, %v708
    %712 = vrot.lane.b32.xlu0 %v710, 96
    %v713 = vpop.permute.xlu0 %712
    %vm715 = vcmask 123904
    %716 = vst.msk [vmem:[#allocation10] sm:$0x3] %vm715, %v713
    %v717 = vsel %vm649, %v713, 0
    %719 = vmatpush.msra.mxu0 0.0
    %720 = vmatpush.msra.mxu0 0.0
    %721 = vmatpush.msra.mxu0 0.0
    %722 = vmatpush.msra.mxu0 0.0
    %723 = vmatpush.msra.mxu0 0.0
    %724 = vmatpush.msra.mxu0 0.0
    %725 = vmatpush.msra.mxu0 0.0
    %726 = vmatpush.msra.mxu0 0.0
    %727 = vmatpush.msra.mxu0 0.0
    %728 = vmatpush.msra.mxu0 0.0
    %729 = vmatpush.msra.mxu0 0.0
    %730 = vmatpush.msra.mxu0 0.0
    %731 = vmatpush.msra.mxu0 0.0
    %732 = vmatpush.msra.mxu0 0.0
    %733 = vmatpush.msra.mxu0 %v93
    %734 = vmatpush.msra.mxu0 %v92
    %735 = vmatmul.f32.gmra.mxu0 %v717
    %v736 = vpop.f32.mrf.mxu0
    %v737 = vadd.f32 0.0, %v736
    %738 = vdwg.mxu0
    %v739 = vadd.f32 %v647, %v737
    %v740 = vxor.u32 %v739, 2147483648
    %v741 = vmul.f32 %v740, 1.442695
    %v742 = vpow.pop %v741
    %v743 = vadd.f32 %v742, 1.0
    %v744 = vrcp.pop %v743
    %v745 = vmul.f32 %v743, %v744
    %v746 = vsub.f32 1.0, %v745
    %v747 = vmul.f32 %v744, %v746
    %v748 = vadd.f32 %v744, %v747
    %vm749 = vweird.f32 %v743
    %vm750 = vweird.f32 %v744
    %vm751 = vmor %vm749, %vm750
    %v752 = vsel %vm751, %v744, %v748
    %v753 = vand.u32 2147483647, %v743
    %vm754 = vcmp.eq.f32.partialorder %v753, 8.507059e+37
    %v755 = vand.u32 %v743, 2147483648
    %v756 = vor.u32 1.1754944e-38, %v755
    %v757 = vsel %vm754, %v756, %v752
    %v758 = vmul.f32 1.0, %v757
    %v759 = vmul.f32 %v758, 2.0
    %v760 = vsub.f32 %v759, 1.0
    %v761 = vmul.f32 %v758, %v704
    %763 = vrot.lane.b32.xlu0 %v760, 80
    %v764 = vpop.permute.xlu0 %763
    %v766 = vmul.f32 %v758, %v764
    %768 = vrot.lane.b32.xlu0 %v766, 16
    %v769 = vpop.permute.xlu0 %768
    %v771 = vadd.f32 %v761, %v769
    %v772 = vtanh.pop %v771
    %774 = vrot.lane.b32.xlu0 %v772, 16
    %v775 = vpop.permute.xlu0 %774
    %v777 = vmul.f32 %v758, %v775
    %779 = vrot.lane.b32.xlu0 %v777, 112
    %v780 = vpop.permute.xlu0 %779
    %vm782 = vcmask 255104
    %783 = vst.msk [vmem:[#allocation10] sm:$0x3] %vm782, %v780
    %784 = vrot.lane.b32.xlu0 %v777, 96
    %v785 = vpop.permute.xlu0 %784
    %v786 = vsel %vm649, %v785, 0
    %788 = vmatpush.msra.mxu0 0.0
    %789 = vmatpush.msra.mxu0 0.0
    %790 = vmatpush.msra.mxu0 0.0
    %791 = vmatpush.msra.mxu0 0.0
    %792 = vmatpush.msra.mxu0 0.0
    %793 = vmatpush.msra.mxu0 0.0
    %794 = vmatpush.msra.mxu0 0.0
    %795 = vmatpush.msra.mxu0 0.0
    %796 = vmatpush.msra.mxu0 0.0
    %797 = vmatpush.msra.mxu0 0.0
    %798 = vmatpush.msra.mxu0 0.0
    %799 = vmatpush.msra.mxu0 0.0
    %800 = vmatpush.msra.mxu0 0.0
    %801 = vmatpush.msra.mxu0 0.0
    %802 = vmatpush.msra.mxu0 %v93
    %803 = vmatpush.msra.mxu0 %v92
    %804 = vmatmul.f32.gmra.mxu0 %v786
    %v805 = vpop.f32.mrf.mxu0
    %v806 = vadd.f32 0.0, %v805
    %807 = vdwg.mxu0
    %v808 = vadd.f32 %v647, %v806
    %v809 = vxor.u32 %v808, 2147483648
    %v810 = vmul.f32 %v809, 1.442695
    %v811 = vpow.pop %v810
    %v812 = vadd.f32 %v811, 1.0
    %v813 = vrcp.pop %v812
    %v814 = vmul.f32 %v812, %v813
    %v815 = vsub.f32 1.0, %v814
    %v816 = vmul.f32 %v813, %v815
    %v817 = vadd.f32 %v813, %v816
    %vm818 = vweird.f32 %v812
    %vm819 = vweird.f32 %v813
    %vm820 = vmor %vm818, %vm819
    %v821 = vsel %vm820, %v813, %v817
    %v822 = vand.u32 2147483647, %v812
    %vm823 = vcmp.eq.f32.partialorder %v822, 8.507059e+37
    %v824 = vand.u32 %v812, 2147483648
    %v825 = vor.u32 1.1754944e-38, %v824
    %v826 = vsel %vm823, %v825, %v821
    %v827 = vmul.f32 1.0, %v826
    %v828 = vmul.f32 %v827, 2.0
    %v829 = vsub.f32 %v828, 1.0
    %v830 = vmul.f32 %v827, %v771
    %832 = vrot.lane.b32.xlu0 %v829, 80
    %v833 = vpop.permute.xlu0 %832
    %v835 = vmul.f32 %v827, %v833
    %837 = vrot.lane.b32.xlu0 %v835, 16
    %v838 = vpop.permute.xlu0 %837
    %v840 = vadd.f32 %v830, %v838
    %v841 = vtanh.pop %v840
    %843 = vrot.lane.b32.xlu0 %v841, 16
    %v844 = vpop.permute.xlu0 %843
    %v846 = vmul.f32 %v827, %v844
    %vm847 = vcmask 386304
    %848 = vst.msk [vmem:[#allocation10] sm:$0x3] %vm847, %v846
    %850 = vrot.lane.b32.xlu0 %v846, 96
    %v851 = vpop.permute.xlu0 %850
    %v852 = vsel %vm649, %v851, 0
    %854 = vmatpush.msra.mxu0 0.0
    %855 = vmatpush.msra.mxu0 0.0
    %856 = vmatpush.msra.mxu0 0.0
    %857 = vmatpush.msra.mxu0 0.0
    %858 = vmatpush.msra.mxu0 0.0
    %859 = vmatpush.msra.mxu0 0.0
    %860 = vmatpush.msra.mxu0 0.0
    %861 = vmatpush.msra.mxu0 0.0
    %862 = vmatpush.msra.mxu0 0.0
    %863 = vmatpush.msra.mxu0 0.0
    %864 = vmatpush.msra.mxu0 0.0
    %865 = vmatpush.msra.mxu0 0.0
    %866 = vmatpush.msra.mxu0 0.0
    %867 = vmatpush.msra.mxu0 0.0
    %868 = vmatpush.msra.mxu0 %v93
    %869 = vmatpush.msra.mxu0 %v92
    %870 = vmatmul.f32.gmra.mxu0 %v852
    %v871 = vpop.f32.mrf.mxu0
    %v872 = vadd.f32 0.0, %v871
    %873 = vdwg.mxu0
    %v874 = vadd.f32 %v647, %v872
    %v875 = vxor.u32 %v874, 2147483648
    %v876 = vmul.f32 %v875, 1.442695
    %v877 = vpow.pop %v876
    %v878 = vadd.f32 %v877, 1.0
    %v879 = vrcp.pop %v878
    %v880 = vmul.f32 %v878, %v879
    %v881 = vsub.f32 1.0, %v880
    %v882 = vmul.f32 %v879, %v881
    %v883 = vadd.f32 %v879, %v882
    %vm884 = vweird.f32 %v878
    %vm885 = vweird.f32 %v879
    %vm886 = vmor %vm884, %vm885
    %v887 = vsel %vm886, %v879, %v883
    %v888 = vand.u32 2147483647, %v878
    %vm889 = vcmp.eq.f32.partialorder %v888, 8.507059e+37
    %v890 = vand.u32 %v878, 2147483648
    %v891 = vor.u32 1.1754944e-38, %v890
    %v892 = vsel %vm889, %v891, %v887
    %v893 = vmul.f32 1.0, %v892
    %v894 = vmul.f32 %v893, 2.0
    %v895 = vsub.f32 %v894, 1.0
    %v896 = vmul.f32 %v893, %v840
    %898 = vrot.lane.b32.xlu0 %v895, 80
    %v899 = vpop.permute.xlu0 %898
    %v901 = vmul.f32 %v893, %v899
    %903 = vrot.lane.b32.xlu0 %v901, 16
    %v904 = vpop.permute.xlu0 %903
    %v906 = vadd.f32 %v896, %v904
    %v907 = vtanh.pop %v906
    %909 = vrot.lane.b32.xlu0 %v907, 16
    %v910 = vpop.permute.xlu0 %909
    %v912 = vmul.f32 %v893, %v910
    %914 = vrot.lane.b32.xlu0 %v912, 16
    %v915 = vpop.permute.xlu0 %914
    %vm917 = vcmask 517504
    %918 = vst.msk [vmem:[#allocation10] sm:$0x3] %vm917, %v915
    %919 = vrot.lane.b32.xlu0 %v912, 96
    %v920 = vpop.permute.xlu0 %919
    %v921 = vsel %vm649, %v920, 0
    %923 = vmatpush.msra.mxu0 0.0
    %924 = vmatpush.msra.mxu0 0.0
    %925 = vmatpush.msra.mxu0 0.0
    %926 = vmatpush.msra.mxu0 0.0
    %927 = vmatpush.msra.mxu0 0.0
    %928 = vmatpush.msra.mxu0 0.0
    %929 = vmatpush.msra.mxu0 0.0
    %930 = vmatpush.msra.mxu0 0.0
    %931 = vmatpush.msra.mxu0 0.0
    %932 = vmatpush.msra.mxu0 0.0
    %933 = vmatpush.msra.mxu0 0.0
    %934 = vmatpush.msra.mxu0 0.0
    %935 = vmatpush.msra.mxu0 0.0
    %936 = vmatpush.msra.mxu0 0.0
    %937 = vmatpush.msra.mxu0 %v93
    %938 = vmatpush.msra.mxu0 %v92
    %939 = vmatmul.f32.gmra.mxu0 %v921
    %v940 = vpop.f32.mrf.mxu0
    %v941 = vadd.f32 0.0, %v940
    %942 = vdwg.mxu0
    %v943 = vadd.f32 %v647, %v941
    %v944 = vxor.u32 %v943, 2147483648
    %v945 = vmul.f32 %v944, 1.442695
    %v946 = vpow.pop %v945
    %v947 = vadd.f32 %v946, 1.0
    %v948 = vrcp.pop %v947
    %v949 = vmul.f32 %v947, %v948
    %v950 = vsub.f32 1.0, %v949
    %v951 = vmul.f32 %v948, %v950
    %v952 = vadd.f32 %v948, %v951
    %vm953 = vweird.f32 %v947
    %vm954 = vweird.f32 %v948
    %vm955 = vmor %vm953, %vm954
    %v956 = vsel %vm955, %v948, %v952
    %v957 = vand.u32 2147483647, %v947
    %vm958 = vcmp.eq.f32.partialorder %v957, 8.507059e+37
    %v959 = vand.u32 %v947, 2147483648
    %v960 = vor.u32 1.1754944e-38, %v959
    %v961 = vsel %vm958, %v960, %v956
    %v962 = vmul.f32 1.0, %v961
    %v963 = vmul.f32 %v962, 2.0
    %v964 = vsub.f32 %v963, 1.0
    %v965 = vmul.f32 %v962, %v906
    %967 = vrot.lane.b32.xlu0 %v964, 80
    %v968 = vpop.permute.xlu0 %967
    %v970 = vmul.f32 %v962, %v968
    %972 = vrot.lane.b32.xlu0 %v970, 16
    %v973 = vpop.permute.xlu0 %972
    %v975 = vadd.f32 %v965, %v973
    %v976 = vtanh.pop %v975
    %978 = vrot.lane.b32.xlu0 %v976, 16
    %v979 = vpop.permute.xlu0 %978
    %v981 = vmul.f32 %v962, %v979
    %983 = vrot.lane.b32.xlu0 %v981, 32
    %v984 = vpop.permute.xlu0 %983
    %vm986 = vcmask 648704
    %987 = vst.msk [vmem:[#allocation10] sm:$0x3] %vm986, %v984
    %988 = vrot.lane.b32.xlu0 %v981, 96
    %v989 = vpop.permute.xlu0 %988
    %v990 = vsel %vm649, %v989, 0
    %992 = vmatpush.msra.mxu0 0.0
    %993 = vmatpush.msra.mxu0 0.0
    %994 = vmatpush.msra.mxu0 0.0
    %995 = vmatpush.msra.mxu0 0.0
    %996 = vmatpush.msra.mxu0 0.0
    %997 = vmatpush.msra.mxu0 0.0
    %998 = vmatpush.msra.mxu0 0.0
    %999 = vmatpush.msra.mxu0 0.0
    %1000 = vmatpush.msra.mxu0 0.0
    %1001 = vmatpush.msra.mxu0 0.0
    %1002 = vmatpush.msra.mxu0 0.0
    %1003 = vmatpush.msra.mxu0 0.0
    %1004 = vmatpush.msra.mxu0 0.0
    %1005 = vmatpush.msra.mxu0 0.0
    %1006 = vmatpush.msra.mxu0 %v93
    %1007 = vmatpush.msra.mxu0 %v92
    %1008 = vmatmul.f32.gmra.mxu0 %v990
    %v1009 = vpop.f32.mrf.mxu0
    %v1010 = vadd.f32 0.0, %v1009
    %1011 = vdwg.mxu0
    %v1012 = vadd.f32 %v647, %v1010
    %v1013 = vxor.u32 %v1012, 2147483648
    %v1014 = vmul.f32 %v1013, 1.442695
    %v1015 = vpow.pop %v1014
    %v1016 = vadd.f32 %v1015, 1.0
    %v1017 = vrcp.pop %v1016
    %v1018 = vmul.f32 %v1016, %v1017
    %v1019 = vsub.f32 1.0, %v1018
    %v1020 = vmul.f32 %v1017, %v1019
    %v1021 = vadd.f32 %v1017, %v1020
    %vm1022 = vweird.f32 %v1016
    %vm1023 = vweird.f32 %v1017
    %vm1024 = vmor %vm1022, %vm1023
    %v1025 = vsel %vm1024, %v1017, %v1021
    %v1026 = vand.u32 2147483647, %v1016
    %vm1027 = vcmp.eq.f32.partialorder %v1026, 8.507059e+37
    %v1028 = vand.u32 %v1016, 2147483648
    %v1029 = vor.u32 1.1754944e-38, %v1028
    %v1030 = vsel %vm1027, %v1029, %v1025
    %v1031 = vmul.f32 1.0, %v1030
    %v1032 = vmul.f32 %v1031, 2.0
    %v1033 = vsub.f32 %v1032, 1.0
    %v1034 = vmul.f32 %v1031, %v975
    %1036 = vrot.lane.b32.xlu0 %v1033, 80
    %v1037 = vpop.permute.xlu0 %1036
    %v1039 = vmul.f32 %v1031, %v1037
    %1041 = vrot.lane.b32.xlu0 %v1039, 16
    %v1042 = vpop.permute.xlu0 %1041
    %v1044 = vadd.f32 %v1034, %v1042
    %v1045 = vtanh.pop %v1044
    %1047 = vrot.lane.b32.xlu0 %v1045, 16
    %v1048 = vpop.permute.xlu0 %1047
    %v1050 = vmul.f32 %v1031, %v1048
    %1052 = vrot.lane.b32.xlu0 %v1050, 48
    %v1053 = vpop.permute.xlu0 %1052
    %vm1055 = vcmask 779904
    %1056 = vst.msk [vmem:[#allocation10] sm:$0x3] %vm1055, %v1053
    %1057 = vrot.lane.b32.xlu0 %v1050, 96
    %v1058 = vpop.permute.xlu0 %1057
    %v1059 = vsel %vm649, %v1058, 0
    %1061 = vmatpush.msra.mxu0 0.0
    %1062 = vmatpush.msra.mxu0 0.0
    %1063 = vmatpush.msra.mxu0 0.0
    %1064 = vmatpush.msra.mxu0 0.0
    %1065 = vmatpush.msra.mxu0 0.0
    %1066 = vmatpush.msra.mxu0 0.0
    %1067 = vmatpush.msra.mxu0 0.0
    %1068 = vmatpush.msra.mxu0 0.0
    %1069 = vmatpush.msra.mxu0 0.0
    %1070 = vmatpush.msra.mxu0 0.0
    %1071 = vmatpush.msra.mxu0 0.0
    %1072 = vmatpush.msra.mxu0 0.0
    %1073 = vmatpush.msra.mxu0 0.0
    %1074 = vmatpush.msra.mxu0 0.0
    %1075 = vmatpush.msra.mxu0 %v93
    %1076 = vmatpush.msra.mxu0 %v92
    %1077 = vmatmul.f32.gmra.mxu0 %v1059
    %v1078 = vpop.f32.mrf.mxu0
    %v1079 = vadd.f32 0.0, %v1078
    %1080 = vdwg.mxu0
    %v1081 = vadd.f32 %v647, %v1079
    %v1082 = vxor.u32 %v1081, 2147483648
    %v1083 = vmul.f32 %v1082, 1.442695
    %v1084 = vpow.pop %v1083
    %v1085 = vadd.f32 %v1084, 1.0
    %v1086 = vrcp.pop %v1085
    %v1087 = vmul.f32 %v1085, %v1086
    %v1088 = vsub.f32 1.0, %v1087
    %v1089 = vmul.f32 %v1086, %v1088
    %v1090 = vadd.f32 %v1086, %v1089
    %vm1091 = vweird.f32 %v1085
    %vm1092 = vweird.f32 %v1086
    %vm1093 = vmor %vm1091, %vm1092
    %v1094 = vsel %vm1093, %v1086, %v1090
    %v1095 = vand.u32 2147483647, %v1085
    %vm1096 = vcmp.eq.f32.partialorder %v1095, 8.507059e+37
    %v1097 = vand.u32 %v1085, 2147483648
    %v1098 = vor.u32 1.1754944e-38, %v1097
    %v1099 = vsel %vm1096, %v1098, %v1094
    %v1100 = vmul.f32 1.0, %v1099
    %v1101 = vmul.f32 %v1100, 2.0
    %v1102 = vsub.f32 %v1101, 1.0
    %v1103 = vmul.f32 %v1100, %v1044
    %1105 = vrot.lane.b32.xlu0 %v1102, 80
    %v1106 = vpop.permute.xlu0 %1105
    %v1108 = vmul.f32 %v1100, %v1106
    %1110 = vrot.lane.b32.xlu0 %v1108, 16
    %v1111 = vpop.permute.xlu0 %1110
    %v1113 = vadd.f32 %v1103, %v1111
    %v1114 = vtanh.pop %v1113
    %1116 = vrot.lane.b32.xlu0 %v1114, 16
    %v1117 = vpop.permute.xlu0 %1116
    %v1119 = vmul.f32 %v1100, %v1117
    %1121 = vrot.lane.b32.xlu0 %v1119, 64
    %v1122 = vpop.permute.xlu0 %1121
    %vm1124 = vcmask 911104
    %1125 = vst.msk [vmem:[#allocation10] sm:$0x3] %vm1124, %v1122
    %1126 = vrot.lane.b32.xlu0 %v1119, 96
    %v1127 = vpop.permute.xlu0 %1126
    %v1128 = vsel %vm649, %v1127, 0
    %1130 = vmatpush.msra.mxu0 0.0
    %1131 = vmatpush.msra.mxu0 0.0
    %1132 = vmatpush.msra.mxu0 0.0
    %1133 = vmatpush.msra.mxu0 0.0
    %1134 = vmatpush.msra.mxu0 0.0
    %1135 = vmatpush.msra.mxu0 0.0
    %1136 = vmatpush.msra.mxu0 0.0
    %1137 = vmatpush.msra.mxu0 0.0
    %1138 = vmatpush.msra.mxu0 0.0
    %1139 = vmatpush.msra.mxu0 0.0
    %1140 = vmatpush.msra.mxu0 0.0
    %1141 = vmatpush.msra.mxu0 0.0
    %1142 = vmatpush.msra.mxu0 0.0
    %1143 = vmatpush.msra.mxu0 0.0
    %1144 = vmatpush.msra.mxu0 %v93
    %1145 = vmatpush.msra.mxu0 %v92
    %1146 = vmatmul.f32.gmra.mxu0 %v1128
    %v1147 = vpop.f32.mrf.mxu0
    %v1148 = vadd.f32 0.0, %v1147
    %1149 = vdwg.mxu0
    %v1150 = vadd.f32 %v647, %v1148
    %v1151 = vxor.u32 %v1150, 2147483648
    %v1152 = vmul.f32 %v1151, 1.442695
    %v1153 = vpow.pop %v1152
    %v1154 = vadd.f32 %v1153, 1.0
    %v1155 = vrcp.pop %v1154
    %v1156 = vmul.f32 %v1154, %v1155
    %v1157 = vsub.f32 1.0, %v1156
    %v1158 = vmul.f32 %v1155, %v1157
    %v1159 = vadd.f32 %v1155, %v1158
    %vm1160 = vweird.f32 %v1154
    %vm1161 = vweird.f32 %v1155
    %vm1162 = vmor %vm1160, %vm1161
    %v1163 = vsel %vm1162, %v1155, %v1159
    %v1164 = vand.u32 2147483647, %v1154
    %vm1165 = vcmp.eq.f32.partialorder %v1164, 8.507059e+37
    %v1166 = vand.u32 %v1154, 2147483648
    %v1167 = vor.u32 1.1754944e-38, %v1166
    %v1168 = vsel %vm1165, %v1167, %v1163
    %v1169 = vmul.f32 1.0, %v1168
    %v1170 = vmul.f32 %v1169, 2.0
    %v1171 = vsub.f32 %v1170, 1.0
    %v1172 = vmul.f32 %v1169, %v1113
    %1174 = vrot.lane.b32.xlu0 %v1171, 80
    %v1175 = vpop.permute.xlu0 %1174
    %v1177 = vmul.f32 %v1169, %v1175
    %1179 = vrot.lane.b32.xlu0 %v1177, 16
    %v1180 = vpop.permute.xlu0 %1179
    %v1182 = vadd.f32 %v1172, %v1180
    %v1183 = vtanh.pop %v1182
    %1185 = vrot.lane.b32.xlu0 %v1183, 16
    %v1186 = vpop.permute.xlu0 %1185
    %v1188 = vmul.f32 %v1169, %v1186
    %1190 = vrot.lane.b32.xlu0 %v1188, 80
    %v1191 = vpop.permute.xlu0 %1190
    %vm1193 = vcmask 1042304
    %1194 = vst.msk [vmem:[#allocation10] sm:$0x3] %vm1193, %v1191
    // Predicated region
    $region38: #{tpu_custom_call.1} parent=1 // pred_check
      _
    $region39: #{tpu_custom_call.1} parent=1 // pred_check_branch
      %1196 = sbr.rel (0) target = $region41
    $region40: #{tpu_custom_call.1} parent=1 // pred_region
      %1198 = vsyncadd [#allocation4], 0
      %s1200 = sshll.u32 [#allocation10], 4
      %s1201 = int_to_ptr.vmem [resolvable:$true] %s1200
      %s1202 = sshll.u32 %s5, 4
      %s1203 = int_to_ptr.hbm [resolvable:$true] %s1202
      %1205 = dma.vmem_to_hbm [thread:$0]  %s1201, 32, %s1203, [#allocation4]
    $region41: #{tpu_custom_call.1} parent=1 // pred_fallthru
      _
    // Predicated region
    $region42: #{tpu_custom_call.1} parent=1 // pred_check
      _
    $region43: #{tpu_custom_call.1} parent=1 // pred_check_branch
      %1207 = sbr.rel (0) target = $region45
    $region44: #{tpu_custom_call.1} parent=1 // pred_region
      %1209 = dma.done [#allocation4], 32
    $region45: #{tpu_custom_call.1} parent=1 // pred_fallthru
      _
    %1210 = vsyncpa [#allocation3], 1
    %1211 = vsyncpa [#allocation6], 1
    %1212 = vsyncpa [#allocation9], 1
    %1213 = vsyncpa [#allocation4], 1

</llo_original>
